<compile_context>
chip_gen: v7x
topology: tpu7x:2x2x1
jax: 0.10.0
libtpu: 0.0.40
codegen_flags: <defaults>
</compile_context>

<pallas_src>
import jax
import jax.numpy as jnp
from jax import lax
from jax.experimental import pallas as pl
from jax.experimental.pallas import tpu as pltpu


def _make_fused_kernel(num_layers, H, W, chans):
    """Fused multi-layer conv3x3+BN+ReLU kernel (one batch element per step).

    Ref layout (all lane-dense, minor dim a multiple of 128):
      x_ref       : (1, H, W*chans[0])             flattened NHWC input (f32)
      w_refs[i]   : (3, W*chans[i], W*chans[i+1])  banded per-ky weights (bf16,
                                                   BN scale + kx taps + width
                                                   boundary folded in)
      s_refs[i]   : (1, W*chans[i+1])              BN shift tiled over width (f32)
      o_ref       : (1, H, W*chans[-1])            output slab (f32)
      pad_refs[i] : (H+2, W*chans[i])              row-padded layer-i input (f32)
    """

    def kernel(*refs):
        x_ref = refs[0]
        w_refs = refs[1:1 + num_layers]
        s_refs = refs[1 + num_layers:1 + 2 * num_layers]
        o_ref = refs[1 + 2 * num_layers]
        pad_refs = refs[2 + 2 * num_layers:]

        # Zero only the two halo rows of every slab; the interior rows are
        # fully overwritten below.  (2 stores of (1, W*C) per slab -- cheap.)
        for i in range(num_layers):
            zrow = jnp.zeros((1, W * chans[i]), jnp.float32)
            pad_refs[i][0:1, :] = zrow
            pad_refs[i][H + 1:H + 2, :] = zrow

        # Stage the layer-0 input into the interior of its padded slab.
        pad_refs[0][1:1 + H, :] = x_ref[0]

        for i in range(num_layers):
            cout = chans[i + 1]
            src = pad_refs[i]

            # Accumulator starts at the BN shift (epilogue add folded in).
            acc = jnp.broadcast_to(s_refs[i][...], (H, W * cout))

            # 3x3 conv == 3 banded, lane-aligned MXU matmuls: the row shift
            # handles ky, the banded bf16 weight handles kx and the width
            # boundary.  Accumulate in f32.
            for ky in range(3):
                acc = acc + jnp.dot(
                    src[ky:ky + H, :].astype(jnp.bfloat16),
                    w_refs[i][ky],
                    preferred_element_type=jnp.float32)

            y = jnp.maximum(acc, 0.0)  # ReLU

            if i + 1 < num_layers:
                # Intermediate activation never leaves VMEM.
                pad_refs[i + 1][1:1 + H, :] = y
            else:
                o_ref[0] = y.astype(o_ref.dtype)  # full-width lane-dense store

    return kernel


@jax.jit
def _fused_forward(rgb_nchw, depth_nchw, w_bds, shifts):
    N, c_rgb, H, W = rgb_nchw.shape
    c_depth = depth_nchw.shape[1]
    num_layers = len(w_bds)
    chans = [c_rgb + c_depth] + [w.shape[2] // W for w in w_bds]
    cout = chans[-1]

    # NCHW -> NHWC, concat (== torch.cat(dim=1)), flatten (W, C) onto lanes.
    rgb = jnp.transpose(rgb_nchw, (0, 2, 3, 1))
    depth = jnp.transpose(depth_nchw, (0, 2, 3, 1))
    x = jnp.concatenate([rgb, depth], axis=-1)
    x_flat = x.reshape(N, H, W * chans[0])

    in_specs = [pl.BlockSpec((1, H, W * chans[0]), lambda n: (n, 0, 0))]
    # Grid-invariant operands: constant index map, so they are DMA'd only once.
    # TODO(synk): single-buffer these (pipeline_mode=pl.Buffered(1)) once that
    # path is guaranteed; at bf16 they are small enough here that the default
    # double-buffered VMEM allocation is harmless.
    in_specs += [pl.BlockSpec(w.shape, lambda n: (0, 0, 0)) for w in w_bds]
    in_specs += [pl.BlockSpec(s.shape, lambda n: (0, 0)) for s in shifts]

    out_flat = pl.pallas_call(
        _make_fused_kernel(num_layers, H, W, chans),
        out_shape=jax.ShapeDtypeStruct((N, H, W * cout), jnp.float32),
        grid_spec=pltpu.PrefetchScalarGridSpec(
            num_scalar_prefetch=0,
            grid=(N,),
            in_specs=in_specs,
            out_specs=pl.BlockSpec((1, H, W * cout), lambda n: (n, 0, 0)),
            scratch_shapes=[pltpu.VMEM((H + 2, W * c), jnp.float32)
                            for c in chans[:-1]],
        ),
        compiler_params=pltpu.CompilerParams(
            dimension_semantics=("parallel",)),
    )(x_flat, *w_bds, *shifts)

    out = out_flat.reshape(N, H, W, cout)
    return jnp.transpose(out, (0, 3, 1, 2))


class ConvFuseNetPallas:
    """Inference-mode re-implementation of ConvFuseNet's forward pass."""

    def __init__(self, rgb_nIn, depth_nIn, nOut, num_layers=2, seed=0):
        self.rgb_nIn = rgb_nIn
        self.depth_nIn = depth_nIn
        self.nOut = nOut
        self.num_layers = num_layers
        self.eps = 1e-5

        key = jax.random.PRNGKey(seed)
        self.weights = []         # (3,3,Cin,Cout) HWIO conv weights (f32)
        self.bn_scales = []       # (Cout,)
        self.bn_shifts = []       # (Cout,)
        self.folded_weights = []  # conv weight * BN scale (folded along Cout)
        for i in range(num_layers):
            cin = rgb_nIn + depth_nIn if i == 0 else nOut
            key, sub = jax.random.split(key)
            # normal_init(m, std=0.001): conv weight ~ N(0, 0.001^2), no bias.
            w = 0.001 * jax.random.normal(sub, (3, 3, cin, nOut), jnp.float32)
            self.weights.append(w)
            # BatchNorm2d after constant_init(1): gamma=1, beta=0,
            # running_mean=0, running_var=1.
            self.bn_scales.append(jnp.ones((nOut,), jnp.float32))
            self.bn_shifts.append(jnp.zeros((nOut,), jnp.float32))
            self.folded_weights.append(w)
        self._prepared = {}  # spatial width W -> packed kernel-side params

    def load_bn_stats(self, layer_idx, gamma, beta, running_mean, running_var):
        """Fold arbitrary (e.g. trained) inference-mode BN stats into the kernel."""
        scale = gamma / jnp.sqrt(running_var + self.eps)
        shift = beta - running_mean * scale
        self.bn_scales[layer_idx] = scale
        self.bn_shifts[layer_idx] = shift
        self.folded_weights[layer_idx] = (
            self.weights[layer_idx] * scale[None, None, None, :])
        self._prepared.clear()

    def _prepare(self, W):
        # Build (once per spatial width, outside jit) the banded per-ky weights
        # B_ky = sum_kx shift(W, kx) (kron) w_folded[ky, kx]  in bf16, plus the
        # width-tiled BN shifts in f32.
        if W not in self._prepared:
            w_bds, shifts = [], []
            for i in range(self.num_layers):
                wf = self.folded_weights[i]            # (3, 3, Cin, Cout)
                cin, cout = wf.shape[2], wf.shape[3]
                taps = []
                for ky in range(3):
                    b = jnp.zeros((W * cin, W * cout), jnp.float32)
                    for kx in range(3):
                        # ones at (w_in, w_out) with w_in == w_out + kx - 1;
                        # the missing bands at w_out = 0 / W-1 implement the
                        # SAME-padding width boundary exactly.
                        band = jnp.eye(W, W, k=1 - kx, dtype=jnp.float32)
                        b = b + jnp.kron(band, wf[ky, kx])
                    taps.append(b)
                w_bds.append(jnp.stack(taps, axis=0).astype(jnp.bfloat16))
                shifts.append(jnp.tile(self.bn_shifts[i], W).reshape(1, -1))
            self._prepared[W] = (tuple(w_bds), tuple(shifts))
        return self._prepared[W]

    def __call__(self, rgb_feat_nchw, depth_feat_nchw):
        w_bds, shifts = self._prepare(rgb_feat_nchw.shape[3])
        return _fused_forward(rgb_feat_nchw, depth_feat_nchw, w_bds, shifts)


def _reference_forward(model, rgb_nchw, depth_nchw):
    """Pure-JAX (XLA conv, f32) reference for correctness checking."""
    rgb = jnp.transpose(rgb_nchw, (0, 2, 3, 1))
    depth = jnp.transpose(depth_nchw, (0, 2, 3, 1))
    x = jnp.concatenate([rgb, depth], axis=-1)
    for i in range(model.num_layers):
        x = lax.conv_general_dilated(
            x, model.weights[i], window_strides=(1, 1), padding="SAME",
            dimension_numbers=("NHWC", "HWIO", "NHWC"))
        x = x * model.bn_scales[i] + model.bn_shifts[i]
        x = jnp.maximum(x, 0.0)
    return jnp.transpose(x, (0, 3, 1, 2))


if __name__ == "__main__":
    # Small shapes consistent with the module: batch=2, rgb/depth channels=4,
    # spatial=16, nOut=16.
    N, rgb_nIn, depth_nIn, nOut, H, W = 2, 4, 4, 16, 16, 16

    key = jax.random.PRNGKey(0)
    k1, k2, k3 = jax.random.split(key, 3)
    rgb_feat = jax.random.normal(k1, (N, rgb_nIn, H, W), jnp.float32)      # NCHW
    depth_feat = jax.random.normal(k2, (N, depth_nIn, H, W), jnp.float32)  # NCHW

    model = ConvFuseNetPallas(rgb_nIn, depth_nIn, nOut, num_layers=2, seed=0)

    # 1) Default module init (matches the PyTorch module right after __init__).
    out = jax.block_until_ready(model(rgb_feat, depth_feat))
    assert out.shape == (N, nOut, H, W), out.shape
    ref = jax.block_until_ready(_reference_forward(model, rgb_feat, depth_feat))
    err = float(jnp.max(jnp.abs(out - ref)))
    assert jnp.allclose(out, ref, atol=1e-5, rtol=1e-3), err

    # 2) Non-trivial BN stats (as if loaded from a trained checkpoint) so the
    #    scale folding and the shift/accumulator path are actually exercised.
    keys = jax.random.split(k3, 4 * model.num_layers)
    for i in range(model.num_layers):
        kg, kb, km, kv = keys[4 * i:4 * i + 4]
        gamma = 0.5 + jax.random.uniform(kg, (nOut,), jnp.float32)
        beta = 0.2 * jax.random.normal(kb, (nOut,), jnp.float32)
        mean = 0.2 * jax.random.normal(km, (nOut,), jnp.float32)
        var = 0.5 + jax.random.uniform(kv, (nOut,), jnp.float32)
        model.load_bn_stats(i, gamma, beta, mean, var)

    out2 = jax.block_until_ready(model(rgb_feat, depth_feat))
    ref2 = jax.block_until_ready(_reference_forward(model, rgb_feat, depth_feat))
    err2 = float(jnp.max(jnp.abs(out2 - ref2)))
    # bf16 MXU operands vs. f32 XLA reference -> slightly relaxed tolerance.
    assert jnp.allclose(out2, ref2, atol=2e-4, rtol=1e-2), err2

    print("KERNEL_OK")
</pallas_src>

<mosaic_0001>
module attributes {stable_mosaic.version = 11 : i64} {
  func.func @kernel(%arg0: i32, %arg1: memref<1x16x128xf32, #tpu.memory_space<vmem>>, %arg2: memref<3x128x256xbf16, #tpu.memory_space<vmem>>, %arg3: memref<3x256x256xbf16, #tpu.memory_space<vmem>>, %arg4: memref<1x256xf32, #tpu.memory_space<vmem>>, %arg5: memref<1x256xf32, #tpu.memory_space<vmem>>, %arg6: memref<1x16x256xf32, #tpu.memory_space<vmem>>, %arg7: memref<18x128xf32, #tpu.memory_space<vmem>>, %arg8: memref<18x256xf32, #tpu.memory_space<vmem>>) attributes {dimension_semantics = [#tpu.dimension_semantics<parallel>], iteration_bounds = array<i64: 2>, scalar_prefetch = 0 : i64, scratch_operands = 2 : i64, tpu.core_type = #tpu.core_type<tc>, window_params = [{transform_indices = @transform_0, window_bounds = array<i64: 1, 16, 128>}, {pipeline_mode = #tpu.pipeline_mode<synchronous>, transform_indices = @transform_1, window_bounds = array<i64: 3, 128, 256>}, {pipeline_mode = #tpu.pipeline_mode<synchronous>, transform_indices = @transform_2, window_bounds = array<i64: 3, 256, 256>}, {pipeline_mode = #tpu.pipeline_mode<synchronous>, transform_indices = @transform_3, window_bounds = array<i64: 1, 256>}, {pipeline_mode = #tpu.pipeline_mode<synchronous>, transform_indices = @transform_4, window_bounds = array<i64: 1, 256>}, {transform_indices = @transform_5, window_bounds = array<i64: 1, 16, 256>}]} {
    %cst = arith.constant 0.000000e+00 : f32
    %0 = vector.broadcast %cst : f32 to vector<1x128xf32>
    %c0 = arith.constant 0 : index
    %c0_0 = arith.constant 0 : index
    %1 = vector.load %arg7[%c0, %c0_0] : memref<18x128xf32, #tpu.memory_space<vmem>>, vector<1x128xf32>
    tpu.vector_store %arg7[%c0, %c0_0], %0 {strides = array<i32>} : memref<18x128xf32, #tpu.memory_space<vmem>>, vector<1x128xf32>,
    %c17 = arith.constant 17 : index
    %c0_1 = arith.constant 0 : index
    %2 = vector.load %arg7[%c17, %c0_1] : memref<18x128xf32, #tpu.memory_space<vmem>>, vector<1x128xf32>
    tpu.vector_store %arg7[%c17, %c0_1], %0 {strides = array<i32>} : memref<18x128xf32, #tpu.memory_space<vmem>>, vector<1x128xf32>,
    %cst_2 = arith.constant 0.000000e+00 : f32
    %3 = vector.broadcast %cst_2 : f32 to vector<1x256xf32>
    %c0_3 = arith.constant 0 : index
    %c0_4 = arith.constant 0 : index
    %4 = vector.load %arg8[%c0_3, %c0_4] : memref<18x256xf32, #tpu.memory_space<vmem>>, vector<1x256xf32>
    tpu.vector_store %arg8[%c0_3, %c0_4], %3 {strides = array<i32>} : memref<18x256xf32, #tpu.memory_space<vmem>>, vector<1x256xf32>,
    %c17_5 = arith.constant 17 : index
    %c0_6 = arith.constant 0 : index
    %5 = vector.load %arg8[%c17_5, %c0_6] : memref<18x256xf32, #tpu.memory_space<vmem>>, vector<1x256xf32>
    tpu.vector_store %arg8[%c17_5, %c0_6], %3 {strides = array<i32>} : memref<18x256xf32, #tpu.memory_space<vmem>>, vector<1x256xf32>,
    %c0_7 = arith.constant 0 : index
    %c0_8 = arith.constant 0 : index
    %c0_9 = arith.constant 0 : index
    %6 = vector.load %arg1[%c0_7, %c0_8, %c0_9] : memref<1x16x128xf32, #tpu.memory_space<vmem>>, vector<1x16x128xf32>
    %7 = vector.shape_cast %6 : vector<1x16x128xf32> to vector<16x128xf32>
    %c1 = arith.constant 1 : index
    %c0_10 = arith.constant 0 : index
    %8 = vector.load %arg7[%c1, %c0_10] : memref<18x128xf32, #tpu.memory_space<vmem>>, vector<16x128xf32>
    tpu.vector_store %arg7[%c1, %c0_10], %7 {strides = array<i32>} : memref<18x128xf32, #tpu.memory_space<vmem>>, vector<16x128xf32>,
    %c0_11 = arith.constant 0 : index
    %c0_12 = arith.constant 0 : index
    %9 = vector.load %arg4[%c0_11, %c0_12] : memref<1x256xf32, #tpu.memory_space<vmem>>, vector<1x256xf32>
    %10 = vector.shape_cast %9 : vector<1x256xf32> to vector<1x256xf32>
    %11 = vector.broadcast %10 : vector<1x256xf32> to vector<16x256xf32>
    %c0_13 = arith.constant 0 : index
    %c0_14 = arith.constant 0 : index
    %12 = vector.load %arg7[%c0_13, %c0_14] : memref<18x128xf32, #tpu.memory_space<vmem>>, vector<16x128xf32>
    %13 = arith.truncf %12 : vector<16x128xf32> to vector<16x128xbf16>
    %c0_15 = arith.constant 0 : index
    %c0_16 = arith.constant 0 : index
    %c0_17 = arith.constant 0 : index
    %14 = vector.load %arg2[%c0_15, %c0_16, %c0_17] : memref<3x128x256xbf16, #tpu.memory_space<vmem>>, vector<1x128x256xbf16>
    %15 = vector.shape_cast %14 : vector<1x128x256xbf16> to vector<128x256xbf16>
    %cst_18 = arith.constant dense<0.000000e+00> : vector<16x256xf32>
    %16 = tpu.matmul %13, %15, %cst_18 {dimension_numbers = #tpu.dot_dimension_numbers<[1], [0], [0], [1], [0, 0, 1, 1], [], []>} : vector<16x128xbf16>, vector<128x256xbf16>, vector<16x256xf32> -> vector<16x256xf32>
    %17 = arith.addf %11, %16 : vector<16x256xf32>
    %c1_19 = arith.constant 1 : index
    %c0_20 = arith.constant 0 : index
    %18 = vector.load %arg7[%c1_19, %c0_20] : memref<18x128xf32, #tpu.memory_space<vmem>>, vector<16x128xf32>
    %19 = arith.truncf %18 : vector<16x128xf32> to vector<16x128xbf16>
    %c1_21 = arith.constant 1 : index
    %c0_22 = arith.constant 0 : index
    %c0_23 = arith.constant 0 : index
    %20 = vector.load %arg2[%c1_21, %c0_22, %c0_23] : memref<3x128x256xbf16, #tpu.memory_space<vmem>>, vector<1x128x256xbf16>
    %21 = vector.shape_cast %20 : vector<1x128x256xbf16> to vector<128x256xbf16>
    %cst_24 = arith.constant dense<0.000000e+00> : vector<16x256xf32>
    %22 = tpu.matmul %19, %21, %cst_24 {dimension_numbers = #tpu.dot_dimension_numbers<[1], [0], [0], [1], [0, 0, 1, 1], [], []>} : vector<16x128xbf16>, vector<128x256xbf16>, vector<16x256xf32> -> vector<16x256xf32>
    %23 = arith.addf %17, %22 : vector<16x256xf32>
    %c2 = arith.constant 2 : index
    %c0_25 = arith.constant 0 : index
    %24 = vector.load %arg7[%c2, %c0_25] : memref<18x128xf32, #tpu.memory_space<vmem>>, vector<16x128xf32>
    %25 = arith.truncf %24 : vector<16x128xf32> to vector<16x128xbf16>
    %c2_26 = arith.constant 2 : index
    %c0_27 = arith.constant 0 : index
    %c0_28 = arith.constant 0 : index
    %26 = vector.load %arg2[%c2_26, %c0_27, %c0_28] : memref<3x128x256xbf16, #tpu.memory_space<vmem>>, vector<1x128x256xbf16>
    %27 = vector.shape_cast %26 : vector<1x128x256xbf16> to vector<128x256xbf16>
    %cst_29 = arith.constant dense<0.000000e+00> : vector<16x256xf32>
    %28 = tpu.matmul %25, %27, %cst_29 {dimension_numbers = #tpu.dot_dimension_numbers<[1], [0], [0], [1], [0, 0, 1, 1], [], []>} : vector<16x128xbf16>, vector<128x256xbf16>, vector<16x256xf32> -> vector<16x256xf32>
    %29 = arith.addf %23, %28 : vector<16x256xf32>
    %cst_30 = arith.constant 0.000000e+00 : f32
    %30 = vector.broadcast %cst_30 : f32 to vector<16x256xf32>
    %31 = arith.maximumf %29, %30 : vector<16x256xf32>
    %c1_31 = arith.constant 1 : index
    %c0_32 = arith.constant 0 : index
    %32 = vector.load %arg8[%c1_31, %c0_32] : memref<18x256xf32, #tpu.memory_space<vmem>>, vector<16x256xf32>
    tpu.vector_store %arg8[%c1_31, %c0_32], %31 {strides = array<i32>} : memref<18x256xf32, #tpu.memory_space<vmem>>, vector<16x256xf32>,
    %c0_33 = arith.constant 0 : index
    %c0_34 = arith.constant 0 : index
    %33 = vector.load %arg5[%c0_33, %c0_34] : memref<1x256xf32, #tpu.memory_space<vmem>>, vector<1x256xf32>
    %34 = vector.shape_cast %33 : vector<1x256xf32> to vector<1x256xf32>
    %35 = vector.broadcast %34 : vector<1x256xf32> to vector<16x256xf32>
    %c0_35 = arith.constant 0 : index
    %c0_36 = arith.constant 0 : index
    %36 = vector.load %arg8[%c0_35, %c0_36] : memref<18x256xf32, #tpu.memory_space<vmem>>, vector<16x256xf32>
    %37 = arith.truncf %36 : vector<16x256xf32> to vector<16x256xbf16>
    %c0_37 = arith.constant 0 : index
    %c0_38 = arith.constant 0 : index
    %c0_39 = arith.constant 0 : index
    %38 = vector.load %arg3[%c0_37, %c0_38, %c0_39] : memref<3x256x256xbf16, #tpu.memory_space<vmem>>, vector<1x256x256xbf16>
    %39 = vector.shape_cast %38 : vector<1x256x256xbf16> to vector<256x256xbf16>
    %cst_40 = arith.constant dense<0.000000e+00> : vector<16x256xf32>
    %40 = tpu.matmul %37, %39, %cst_40 {dimension_numbers = #tpu.dot_dimension_numbers<[1], [0], [0], [1], [0, 0, 1, 1], [], []>} : vector<16x256xbf16>, vector<256x256xbf16>, vector<16x256xf32> -> vector<16x256xf32>
    %41 = arith.addf %35, %40 : vector<16x256xf32>
    %c1_41 = arith.constant 1 : index
    %c0_42 = arith.constant 0 : index
    %42 = vector.load %arg8[%c1_41, %c0_42] : memref<18x256xf32, #tpu.memory_space<vmem>>, vector<16x256xf32>
    %43 = arith.truncf %42 : vector<16x256xf32> to vector<16x256xbf16>
    %c1_43 = arith.constant 1 : index
    %c0_44 = arith.constant 0 : index
    %c0_45 = arith.constant 0 : index
    %44 = vector.load %arg3[%c1_43, %c0_44, %c0_45] : memref<3x256x256xbf16, #tpu.memory_space<vmem>>, vector<1x256x256xbf16>
    %45 = vector.shape_cast %44 : vector<1x256x256xbf16> to vector<256x256xbf16>
    %cst_46 = arith.constant dense<0.000000e+00> : vector<16x256xf32>
    %46 = tpu.matmul %43, %45, %cst_46 {dimension_numbers = #tpu.dot_dimension_numbers<[1], [0], [0], [1], [0, 0, 1, 1], [], []>} : vector<16x256xbf16>, vector<256x256xbf16>, vector<16x256xf32> -> vector<16x256xf32>
    %47 = arith.addf %41, %46 : vector<16x256xf32>
    %c2_47 = arith.constant 2 : index
    %c0_48 = arith.constant 0 : index
    %48 = vector.load %arg8[%c2_47, %c0_48] : memref<18x256xf32, #tpu.memory_space<vmem>>, vector<16x256xf32>
    %49 = arith.truncf %48 : vector<16x256xf32> to vector<16x256xbf16>
    %c2_49 = arith.constant 2 : index
    %c0_50 = arith.constant 0 : index
    %c0_51 = arith.constant 0 : index
    %50 = vector.load %arg3[%c2_49, %c0_50, %c0_51] : memref<3x256x256xbf16, #tpu.memory_space<vmem>>, vector<1x256x256xbf16>
    %51 = vector.shape_cast %50 : vector<1x256x256xbf16> to vector<256x256xbf16>
    %cst_52 = arith.constant dense<0.000000e+00> : vector<16x256xf32>
    %52 = tpu.matmul %49, %51, %cst_52 {dimension_numbers = #tpu.dot_dimension_numbers<[1], [0], [0], [1], [0, 0, 1, 1], [], []>} : vector<16x256xbf16>, vector<256x256xbf16>, vector<16x256xf32> -> vector<16x256xf32>
    %53 = arith.addf %47, %52 : vector<16x256xf32>
    %cst_53 = arith.constant 0.000000e+00 : f32
    %54 = vector.broadcast %cst_53 : f32 to vector<16x256xf32>
    %55 = arith.maximumf %53, %54 : vector<16x256xf32>
    %c0_54 = arith.constant 0 : index
    %c0_55 = arith.constant 0 : index
    %c0_56 = arith.constant 0 : index
    %56 = vector.load %arg6[%c0_54, %c0_55, %c0_56] : memref<1x16x256xf32, #tpu.memory_space<vmem>>, vector<1x16x256xf32>
    %57 = vector.shape_cast %56 : vector<1x16x256xf32> to vector<16x256xf32>
    %58 = vector.shape_cast %55 : vector<16x256xf32> to vector<1x16x256xf32>
    tpu.vector_store %arg6[%c0_54, %c0_55, %c0_56], %58 {strides = array<i32>} : memref<1x16x256xf32, #tpu.memory_space<vmem>>, vector<1x16x256xf32>,
    return
  }
  func.func @transform_0(%arg0: i32) -> (i32, i32, i32) {
    %c0_i32 = arith.constant 0 : i32
    %c0_i32_0 = arith.constant 0 : i32
    %c0_i32_1 = arith.constant 0 : i32
    return %arg0, %c0_i32, %c0_i32_0 : i32, i32, i32
  }
  func.func @transform_1(%arg0: i32) -> (i32, i32, i32) {
    %c0_i32 = arith.constant 0 : i32
    %c0_i32_0 = arith.constant 0 : i32
    %c0_i32_1 = arith.constant 0 : i32
    %c0_i32_2 = arith.constant 0 : i32
    return %c0_i32, %c0_i32_0, %c0_i32_1 : i32, i32, i32
  }
  func.func @transform_2(%arg0: i32) -> (i32, i32, i32) {
    %c0_i32 = arith.constant 0 : i32
    %c0_i32_0 = arith.constant 0 : i32
    %c0_i32_1 = arith.constant 0 : i32
    %c0_i32_2 = arith.constant 0 : i32
    return %c0_i32, %c0_i32_0, %c0_i32_1 : i32, i32, i32
  }
  func.func @transform_3(%arg0: i32) -> (i32, i32) {
    %c0_i32 = arith.constant 0 : i32
    %c0_i32_0 = arith.constant 0 : i32
    %c0_i32_1 = arith.constant 0 : i32
    return %c0_i32, %c0_i32_0 : i32, i32
  }
  func.func @transform_4(%arg0: i32) -> (i32, i32) {
    %c0_i32 = arith.constant 0 : i32
    %c0_i32_0 = arith.constant 0 : i32
    %c0_i32_1 = arith.constant 0 : i32
    return %c0_i32, %c0_i32_0 : i32, i32
  }
  func.func @transform_5(%arg0: i32) -> (i32, i32, i32) {
    %c0_i32 = arith.constant 0 : i32
    %c0_i32_0 = arith.constant 0 : i32
    %c0_i32_1 = arith.constant 0 : i32
    return %arg0, %c0_i32, %c0_i32_0 : i32, i32, i32
  }
}

</mosaic_0001>

<llo_original>
// kernel: _fused_forward.1
$region0: #{_fused_forward.1}
  #allocation0 [shape = 'u32[]', space=smem, size = 0x4, offset = 0x4, fixed_abs, tag = 'smem constant byte address 0x4 - core index']
  #allocation1 [shape = 'u32[144,128]{1,0:T(1,128)}', space=vmem, size = 0x12000, scoped, tag = 'internal scratch']
  #allocation2 [shape = 'f32[18,128]{1,0:T(8,128)}', space=vmem, size = 0x3000, scoped, tag = 'scratch operand']
  #allocation3 [shape = 'f32[18,256]{1,0:T(8,128)}', space=vmem, size = 0x6000, scoped, tag = 'scratch operand']
  %s0 = inlined_call_operand.vmem [shape: f32[2,16,128], index: 0, kind: input, shape index: {}]
  %s1 = inlined_call_operand.vmem [shape: bf16[3,128,256], index: 1, kind: input, shape index: {}]
  %s2 = inlined_call_operand.vmem [shape: bf16[3,256,256], index: 2, kind: input, shape index: {}]
  %s3 = inlined_call_operand.vmem [shape: f32[1,256], index: 3, kind: input, shape index: {}]
  %s4 = inlined_call_operand.vmem [shape: f32[1,256], index: 4, kind: input, shape index: {}]
  %s5 = inlined_call_operand.vmem [shape: f32[2,16,256], index: 5, kind: output, shape index: {}]
  %s6 = sld [smem:[#allocation0]]
  $region53: #{_fused_forward.1} parent=0
    _
  %s8 = ssub.s32 1, %s6
  %s9 = scalar_select 0, %s8, %s6
  loop: start=0, step=1, limit=4
  $region2: #{_fused_forward.1} parent=0 // loop_pre_header
    _
  $region3: #{_fused_forward.1} parent=0 // loop_header
    %s11 = sphi 0, %s15
    %p12 = scmp.ge.s32.totalorder %s11, 4
    %s21 = sphi 0, %s23
    %s24 = sphi 0, %s21
    %s25 = sphi 0, %s24
    %s41 = sphi 0, %s25
    %s45 = sphi 0, %s45
    %s47 = sphi 0, %s45
    %s48 = sphi 0, %s47
    %s62 = sphi 0, %s48
    %s66 = sphi 0, %s66
    %s68 = sphi 0, %s66
    %s69 = sphi 0, %s68
    %s83 = sphi 0, %s69
    %s87 = sphi 0, %s87
    %s89 = sphi 0, %s87
    %s90 = sphi 0, %s89
    %s104 = sphi 0, %s90
    %s108 = sphi 0, %s108
    %s110 = sphi 0, %s108
    %s111 = sphi 0, %s110
    %s125 = sphi 0, %s111
    %s131 = sphi 0, %s133
    %s134 = sphi 0, %s131
    %s135 = sphi 0, %s134
    %s151 = sphi 0, %s135
  $region4: #{_fused_forward.1} parent=0 // loop_header_branch
    %14 = sbr.rel (%p12) target = $region8
  $region5: #{_fused_forward.1} parent=0 // loop_body
    %s16 = ssub.s32 %s11, 1
    %s17 = ssub.s32 %s11, 2
    %s18 = sadd.s32 %s11, 1
    %s19 = ssub.s32 %s11, %s18
    %p20 = scmp.eq.s32.totalorder %s19, 0
    %s22 = sadd.s32 %s21, 1
    %s23 = scalar_select %p20, %s21, %s22
    %p26 = pneg %p20
    %p27 = scmp.eq.s32.totalorder %s11, 1
    %p28 = por %p26, %p27
    %p29 = scmp.ne.s32.totalorder %s21, %s24
    %p30 = scmp.eq.s32.totalorder %s11, 0
    %p31 = por %p29, %p30
    %p32 = scmp.ne.s32.totalorder %s21, %s24
    %p33 = scmp.eq.s32.totalorder %s16, 1
    %p34 = por %p32, %p33
    %p35 = scmp.ne.s32.totalorder %s24, %s25
    %p36 = scmp.eq.s32.totalorder %s16, 0
    %p37 = por %p35, %p36
    %p38 = scmp.ne.s32.totalorder %s24, %s25
    %p39 = scmp.eq.s32.totalorder %s17, 1
    %p40 = por %p38, %p39
    %p42 = scmp.ne.s32.totalorder %s25, %s41
    %p43 = scmp.eq.s32.totalorder %s17, 0
    %p44 = por %p42, %p43
    %s46 = sadd.s32 %s45, 1
    %p49 = scmp.eq.s32.totalorder %s11, 1
    %p50 = scmp.ne.s32.totalorder %s45, %s47
    %p51 = scmp.eq.s32.totalorder %s11, 0
    %p52 = por %p50, %p51
    %p53 = scmp.ne.s32.totalorder %s45, %s47
    %p54 = scmp.eq.s32.totalorder %s16, 1
    %p55 = por %p53, %p54
    %p56 = scmp.ne.s32.totalorder %s47, %s48
    %p57 = scmp.eq.s32.totalorder %s16, 0
    %p58 = por %p56, %p57
    %p59 = scmp.ne.s32.totalorder %s47, %s48
    %p60 = scmp.eq.s32.totalorder %s17, 1
    %p61 = por %p59, %p60
    %p63 = scmp.ne.s32.totalorder %s48, %s62
    %p64 = scmp.eq.s32.totalorder %s17, 0
    %p65 = por %p63, %p64
    %s67 = sadd.s32 %s66, 1
    %p70 = scmp.eq.s32.totalorder %s11, 1
    %p71 = scmp.ne.s32.totalorder %s66, %s68
    %p72 = scmp.eq.s32.totalorder %s11, 0
    %p73 = por %p71, %p72
    %p74 = scmp.ne.s32.totalorder %s66, %s68
    %p75 = scmp.eq.s32.totalorder %s16, 1
    %p76 = por %p74, %p75
    %p77 = scmp.ne.s32.totalorder %s68, %s69
    %p78 = scmp.eq.s32.totalorder %s16, 0
    %p79 = por %p77, %p78
    %p80 = scmp.ne.s32.totalorder %s68, %s69
    %p81 = scmp.eq.s32.totalorder %s17, 1
    %p82 = por %p80, %p81
    %p84 = scmp.ne.s32.totalorder %s69, %s83
    %p85 = scmp.eq.s32.totalorder %s17, 0
    %p86 = por %p84, %p85
    %s88 = sadd.s32 %s87, 1
    %p91 = scmp.eq.s32.totalorder %s11, 1
    %p92 = scmp.ne.s32.totalorder %s87, %s89
    %p93 = scmp.eq.s32.totalorder %s11, 0
    %p94 = por %p92, %p93
    %p95 = scmp.ne.s32.totalorder %s87, %s89
    %p96 = scmp.eq.s32.totalorder %s16, 1
    %p97 = por %p95, %p96
    %p98 = scmp.ne.s32.totalorder %s89, %s90
    %p99 = scmp.eq.s32.totalorder %s16, 0
    %p100 = por %p98, %p99
    %p101 = scmp.ne.s32.totalorder %s89, %s90
    %p102 = scmp.eq.s32.totalorder %s17, 1
    %p103 = por %p101, %p102
    %p105 = scmp.ne.s32.totalorder %s90, %s104
    %p106 = scmp.eq.s32.totalorder %s17, 0
    %p107 = por %p105, %p106
    %s109 = sadd.s32 %s108, 1
    %p112 = scmp.eq.s32.totalorder %s11, 1
    %p113 = scmp.ne.s32.totalorder %s108, %s110
    %p114 = scmp.eq.s32.totalorder %s11, 0
    %p115 = por %p113, %p114
    %p116 = scmp.ne.s32.totalorder %s108, %s110
    %p117 = scmp.eq.s32.totalorder %s16, 1
    %p118 = por %p116, %p117
    %p119 = scmp.ne.s32.totalorder %s110, %s111
    %p120 = scmp.eq.s32.totalorder %s16, 0
    %p121 = por %p119, %p120
    %p122 = scmp.ne.s32.totalorder %s110, %s111
    %p123 = scmp.eq.s32.totalorder %s17, 1
    %p124 = por %p122, %p123
    %p126 = scmp.ne.s32.totalorder %s111, %s125
    %p127 = scmp.eq.s32.totalorder %s17, 0
    %p128 = por %p126, %p127
    %s129 = ssub.s32 %s11, %s18
    %p130 = scmp.eq.s32.totalorder %s129, 0
    %s132 = sadd.s32 %s131, 1
    %s133 = scalar_select %p130, %s131, %s132
    %p136 = pneg %p130
    %p137 = scmp.eq.s32.totalorder %s11, 1
    %p138 = por %p136, %p137
    %p139 = scmp.ne.s32.totalorder %s131, %s134
    %p140 = scmp.eq.s32.totalorder %s11, 0
    %p141 = por %p139, %p140
    %p142 = scmp.ne.s32.totalorder %s131, %s134
    %p143 = scmp.eq.s32.totalorder %s16, 1
    %p144 = por %p142, %p143
    %p145 = scmp.ne.s32.totalorder %s134, %s135
    %p146 = scmp.eq.s32.totalorder %s16, 0
    %p147 = por %p145, %p146
    %p148 = scmp.ne.s32.totalorder %s134, %s135
    %p149 = scmp.eq.s32.totalorder %s17, 1
    %p150 = por %p148, %p149
    %p152 = scmp.ne.s32.totalorder %s135, %s151
    %p153 = scmp.eq.s32.totalorder %s17, 0
    %p154 = por %p152, %p153
    %p155 = scmp.le.s32.totalorder 1, %s11
    %p156 = scmp.lt.s32.totalorder %s11, 3
    %p157 = pnand %p155, %p156
    %p158 = pneg %p157
    // Predicated region
    $region9: #{_fused_forward.1} parent=5 // pred_check
      _
    $region10: #{_fused_forward.1} parent=5 // pred_check_branch
      %160 = sbr.rel (%p157) target = $region12
    $region11: #{_fused_forward.1} parent=5 // pred_region
      %s161 = ssub.s32 %s11, 1
      // Predicated region
      $region13: #{_fused_forward.1} parent=11 // pred_check
        %p162 = pneg %p58
      $region14: #{_fused_forward.1} parent=11 // pred_check_branch
        %164 = sbr.rel (%p162) target = $region16
      $region15: #{_fused_forward.1} parent=11 // pred_region
        _
      $region16: #{_fused_forward.1} parent=11 // pred_fallthru
        _
      // Predicated region
      $region17: #{_fused_forward.1} parent=11 // pred_check
        %p165 = pneg %p79
      $region18: #{_fused_forward.1} parent=11 // pred_check_branch
        %167 = sbr.rel (%p165) target = $region20
      $region19: #{_fused_forward.1} parent=11 // pred_region
        _
      $region20: #{_fused_forward.1} parent=11 // pred_fallthru
        _
      // Predicated region
      $region21: #{_fused_forward.1} parent=11 // pred_check
        %p168 = pneg %p100
      $region22: #{_fused_forward.1} parent=11 // pred_check_branch
        %170 = sbr.rel (%p168) target = $region24
      $region23: #{_fused_forward.1} parent=11 // pred_region
        _
      $region24: #{_fused_forward.1} parent=11 // pred_fallthru
        _
      // Predicated region
      $region25: #{_fused_forward.1} parent=11 // pred_check
        %p171 = pneg %p121
      $region26: #{_fused_forward.1} parent=11 // pred_check_branch
        %173 = sbr.rel (%p171) target = $region28
      $region27: #{_fused_forward.1} parent=11 // pred_region
        _
      $region28: #{_fused_forward.1} parent=11 // pred_fallthru
        _
    $region12: #{_fused_forward.1} parent=5 // pred_fallthru
      _
    %p174 = scmp.lt.s32.totalorder %s11, 2
    // Predicated region
    $region29: #{_fused_forward.1} parent=5 // pred_check
      %p175 = pneg %p174
    $region30: #{_fused_forward.1} parent=5 // pred_check_branch
      %177 = sbr.rel (%p175) target = $region32
    $region31: #{_fused_forward.1} parent=5 // pred_region
      // Predicated region
      $region33: #{_fused_forward.1} parent=31 // pred_check
        %p178 = pneg %p31
      $region34: #{_fused_forward.1} parent=31 // pred_check_branch
        %180 = sbr.rel (%p178) target = $region36
      $region35: #{_fused_forward.1} parent=31 // pred_region
        %p181 = scmp.lt.s32.totalorder %s11, 1
        %s182 = scalar_select %p181, %s11, 1
        %s183 = smul.addr %s182, 2
        %s184 = smul.addr %s183, 8
        %s185 = scalar_lea.vmem %s0, %s184
      $region36: #{_fused_forward.1} parent=31 // pred_fallthru
        _
    $region32: #{_fused_forward.1} parent=5 // pred_fallthru
      _
    %p186 = scmp.le.s32.totalorder 1, %s11
    %p187 = scmp.lt.s32.totalorder %s11, 3
    %p188 = pnand %p186, %p187
    %p189 = pneg %p188
    // Predicated region
    $region37: #{_fused_forward.1} parent=5 // pred_check
      _
    $region38: #{_fused_forward.1} parent=5 // pred_check_branch
      %191 = sbr.rel (%p188) target = $region40
    $region39: #{_fused_forward.1} parent=5 // pred_region
      %s192 = ssub.s32 %s11, 1
      %p193 = scmp.lt.s32.totalorder %s16, 1
      %s194 = scalar_select %p193, %s16, 1
      %s195 = smul.addr %s194, 2
      %s196 = smul.addr %s195, 8
      %s197 = scalar_lea.vmem %s0, %s196
      %p198 = pneg %p37
      %p199 = pneg %p34
      %p200 = pneg %p58
      %p201 = pneg %p55
      %p202 = pneg %p79
      %p203 = pneg %p76
      %p204 = pneg %p100
      %p205 = pneg %p97
      %p206 = pneg %p121
      %p207 = pneg %p118
      %p208 = pneg %p147
      %p209 = pneg %p144
      %p210 = scmp.lt.s32.totalorder %s16, 1
      %s211 = scalar_select %p210, %s16, 1
      %s212 = smul.addr %s211, 4
      %s213 = smul.addr %s212, 8
      %s214 = scalar_lea.vmem %s5, %s213
      %p215 = scmp.lt.s32.totalorder %s16, 1
      %s216 = scalar_select %p215, %s16, 1
      %s217 = smul.addr %s216, 2
      %s218 = smul.addr %s217, 8
      %s219 = scalar_lea.vmem %s0, %s218
      %p220 = scmp.lt.s32.totalorder %s16, 1
      %s221 = scalar_select %p220, %s16, 1
      %s222 = smul.addr %s221, 4
      %s223 = smul.addr %s222, 8
      %s224 = scalar_lea.vmem %s5, %s223
      %226 = vst [vmem:[#allocation2] sm:$0x1] 0.0
      %227 = vst [vmem:[#allocation2 + $0x11] sm:$0x1] 0.0
      %v228 = vlaneseq
      %vm229 = vcmp.ge.s32.totalorder %v228, 0
      %vm230 = vcmp.lt.s32.totalorder %v228, 256
      %vm231 = vmand %vm229, %vm230
      %232 = vst.msk [vmem:[#allocation3] ss:$8 sm:$0x3] %vm231, 0.0
      %233 = vst.msk [vmem:[#allocation3] ss:$8 sm:$0x0] %vm231, 0.0
      %s234 = scalar_lea.vmem [#allocation3], 33
      %235 = vst.msk [vmem:[%s234] ss:$8 sm:$0x3] %vm231, 0.0
      %236 = vst.msk [vmem:[%s234] ss:$8 sm:$0x0] %vm231, 0.0
      %v237 = vld [vmem:[%s219] sm:$0xff]
      %v238 = vld [vmem:[%s219 + $0x8] sm:$0xff]
      %239 = vst [vmem:[#allocation2 + $0x1] sm:$0xff] %v237
      %240 = vst [vmem:[#allocation2 + $0x9] sm:$0xff] %v238
      %v241 = vld [vmem:[%s3] sm:$0x3]
      %v243 = vlaneseq
      %v244 = vshrl.u32 %v243, 7
      %v245 = vsub.s32 0, %v244
      %v246 = vrot.slane %v241, %v245
      %v247 = vlaneseq
      %v248 = vshrl.u32 %v247, 7
      %v249 = vsub.s32 1, %v248
      %v250 = vrot.slane %v241, %v249
      %v253 = vld [vmem:[#allocation2] sm:$0xff]
      %v254 = vld [vmem:[#allocation2 + $0x8] sm:$0xff]
      %v255 = vpack.c.bf16 %v254, %v253
      %v256 = vld [vmem:[%s1] sm:$0xff]
      %v257 = vld [vmem:[%s1 + $0x8] sm:$0xff]
      %v258 = vld [vmem:[%s1 + $0x10] sm:$0xff]
      %v259 = vld [vmem:[%s1 + $0x18] sm:$0xff]
      %v260 = vld [vmem:[%s1 + $0x20] sm:$0xff]
      %v261 = vld [vmem:[%s1 + $0x28] sm:$0xff]
      %v262 = vld [vmem:[%s1 + $0x30] sm:$0xff]
      %v263 = vld [vmem:[%s1 + $0x38] sm:$0xff]
      %v264 = vld [vmem:[%s1 + $0x40] sm:$0xff]
      %v265 = vld [vmem:[%s1 + $0x48] sm:$0xff]
      %v266 = vld [vmem:[%s1 + $0x50] sm:$0xff]
      %v267 = vld [vmem:[%s1 + $0x58] sm:$0xff]
      %v268 = vld [vmem:[%s1 + $0x60] sm:$0xff]
      %v269 = vld [vmem:[%s1 + $0x68] sm:$0xff]
      %v270 = vld [vmem:[%s1 + $0x70] sm:$0xff]
      %v271 = vld [vmem:[%s1 + $0x78] sm:$0xff]
      %v288 = vunpack.c.l.b16 %v256
      %v289 = vunpack.c.h.b16 %v256
      %v290 = vunpack.c.l.b16 %v257
      %v291 = vunpack.c.h.b16 %v257
      %v292 = vunpack.c.l.b16 %v258
      %v293 = vunpack.c.h.b16 %v258
      %v294 = vunpack.c.l.b16 %v259
      %v295 = vunpack.c.h.b16 %v259
      %v296 = vunpack.c.l.b16 %v260
      %v297 = vunpack.c.h.b16 %v260
      %v298 = vunpack.c.l.b16 %v261
      %v299 = vunpack.c.h.b16 %v261
      %v300 = vunpack.c.l.b16 %v262
      %v301 = vunpack.c.h.b16 %v262
      %v302 = vunpack.c.l.b16 %v263
      %v303 = vunpack.c.h.b16 %v263
      %v304 = vunpack.c.l.b16 %v264
      %v305 = vunpack.c.h.b16 %v264
      %v306 = vunpack.c.l.b16 %v265
      %v307 = vunpack.c.h.b16 %v265
      %v308 = vunpack.c.l.b16 %v266
      %v309 = vunpack.c.h.b16 %v266
      %v310 = vunpack.c.l.b16 %v267
      %v311 = vunpack.c.h.b16 %v267
      %v312 = vunpack.c.l.b16 %v268
      %v313 = vunpack.c.h.b16 %v268
      %v314 = vunpack.c.l.b16 %v269
      %v315 = vunpack.c.h.b16 %v269
      %v316 = vunpack.c.l.b16 %v270
      %v317 = vunpack.c.h.b16 %v270
      %v318 = vunpack.c.l.b16 %v271
      %v319 = vunpack.c.h.b16 %v271
      %v320 = vpack.c.b16 %v290, %v288
      %v321 = vpack.c.b16 %v291, %v289
      %v322 = vpack.c.b16 %v294, %v292
      %v323 = vpack.c.b16 %v295, %v293
      %v324 = vpack.c.b16 %v298, %v296
      %v325 = vpack.c.b16 %v299, %v297
      %v326 = vpack.c.b16 %v302, %v300
      %v327 = vpack.c.b16 %v303, %v301
      %v328 = vpack.c.b16 %v306, %v304
      %v329 = vpack.c.b16 %v307, %v305
      %v330 = vpack.c.b16 %v310, %v308
      %v331 = vpack.c.b16 %v311, %v309
      %v332 = vpack.c.b16 %v314, %v312
      %v333 = vpack.c.b16 %v315, %v313
      %v334 = vpack.c.b16 %v318, %v316
      %v335 = vpack.c.b16 %v319, %v317
      %352 = vmatprep.subr.bf16.mxu0 %v321
      %353 = vmatpush1.bf16.msra.mxu0 %v320
      %354 = vmatprep.subr.bf16.mxu0 %v323
      %355 = vmatpush1.bf16.msra.mxu0 %v322
      %356 = vmatprep.subr.bf16.mxu0 %v325
      %357 = vmatpush1.bf16.msra.mxu0 %v324
      %358 = vmatprep.subr.bf16.mxu0 %v327
      %359 = vmatpush1.bf16.msra.mxu0 %v326
      %360 = vmatprep.subr.bf16.mxu0 %v329
      %361 = vmatpush1.bf16.msra.mxu0 %v328
      %362 = vmatprep.subr.bf16.mxu0 %v331
      %363 = vmatpush1.bf16.msra.mxu0 %v330
      %364 = vmatprep.subr.bf16.mxu0 %v333
      %365 = vmatpush1.bf16.msra.mxu0 %v332
      %366 = vmatprep.subr.bf16.mxu0 %v335
      %367 = vmatpush1.bf16.msra.mxu0 %v334
      %368 = vmatprep.subr.bf16.mxu0 0
      %369 = vmatpush1.bf16.msra.mxu0 0
      %370 = vmatprep.subr.bf16.mxu0 0
      %371 = vmatpush1.bf16.msra.mxu0 0
      %372 = vmatprep.subr.bf16.mxu0 0
      %373 = vmatpush1.bf16.msra.mxu0 0
      %374 = vmatprep.subr.bf16.mxu0 0
      %375 = vmatpush1.bf16.msra.mxu0 0
      %376 = vmatprep.subr.bf16.mxu0 0
      %377 = vmatpush1.bf16.msra.mxu0 0
      %378 = vmatprep.subr.bf16.mxu0 0
      %379 = vmatpush1.bf16.msra.mxu0 0
      %380 = vmatprep.subr.bf16.mxu0 0
      %381 = vmatpush1.bf16.msra.mxu0 0
      %382 = vmatprep.subr.bf16.mxu0 0
      %383 = vmatpush1.bf16.msra.mxu0 0
      %384 = vmatprep.mubr.bf16.mxu0 0
      %385 = vmatmul.mubr.bf16.gmra.mrb[0].mxu0 %v255
      %v386 = vpop.f32.mrb[0].mxu0
      %v387 = vadd.f32 0.0, %v386
      %v388 = vpop.f32.mrb[0].mxu0
      %v389 = vadd.f32 0.0, %v388
      %v390 = vpop.f32.mrb[0].mxu0
      %v391 = vadd.f32 0.0, %v390
      %v392 = vpop.f32.mrb[0].mxu0
      %v393 = vadd.f32 0.0, %v392
      %394 = vdwg.mxu0
      %v395 = vadd.f32 %v246, %v387
      %v396 = vadd.f32 %v250, %v389
      %v397 = vadd.f32 %v246, %v391
      %v398 = vadd.f32 %v250, %v393
      %v399 = vld [vmem:[#allocation2 + $0x1] sm:$0xff]
      %v400 = vld [vmem:[#allocation2 + $0x9] sm:$0xff]
      %v401 = vpack.c.bf16 %v400, %v399
      %s402 = scalar_lea.vmem %s1, 128
      %v403 = vld [vmem:[%s402] sm:$0xff]
      %v404 = vld [vmem:[%s402 + $0x8] sm:$0xff]
      %v405 = vld [vmem:[%s402 + $0x10] sm:$0xff]
      %v406 = vld [vmem:[%s402 + $0x18] sm:$0xff]
      %v407 = vld [vmem:[%s402 + $0x20] sm:$0xff]
      %v408 = vld [vmem:[%s402 + $0x28] sm:$0xff]
      %v409 = vld [vmem:[%s402 + $0x30] sm:$0xff]
      %v410 = vld [vmem:[%s402 + $0x38] sm:$0xff]
      %v411 = vld [vmem:[%s402 + $0x40] sm:$0xff]
      %v412 = vld [vmem:[%s402 + $0x48] sm:$0xff]
      %v413 = vld [vmem:[%s402 + $0x50] sm:$0xff]
      %v414 = vld [vmem:[%s402 + $0x58] sm:$0xff]
      %v415 = vld [vmem:[%s402 + $0x60] sm:$0xff]
      %v416 = vld [vmem:[%s402 + $0x68] sm:$0xff]
      %v417 = vld [vmem:[%s402 + $0x70] sm:$0xff]
      %v418 = vld [vmem:[%s402 + $0x78] sm:$0xff]
      %v435 = vunpack.c.l.b16 %v403
      %v436 = vunpack.c.h.b16 %v403
      %v437 = vunpack.c.l.b16 %v404
      %v438 = vunpack.c.h.b16 %v404
      %v439 = vunpack.c.l.b16 %v405
      %v440 = vunpack.c.h.b16 %v405
      %v441 = vunpack.c.l.b16 %v406
      %v442 = vunpack.c.h.b16 %v406
      %v443 = vunpack.c.l.b16 %v407
      %v444 = vunpack.c.h.b16 %v407
      %v445 = vunpack.c.l.b16 %v408
      %v446 = vunpack.c.h.b16 %v408
      %v447 = vunpack.c.l.b16 %v409
      %v448 = vunpack.c.h.b16 %v409
      %v449 = vunpack.c.l.b16 %v410
      %v450 = vunpack.c.h.b16 %v410
      %v451 = vunpack.c.l.b16 %v411
      %v452 = vunpack.c.h.b16 %v411
      %v453 = vunpack.c.l.b16 %v412
      %v454 = vunpack.c.h.b16 %v412
      %v455 = vunpack.c.l.b16 %v413
      %v456 = vunpack.c.h.b16 %v413
      %v457 = vunpack.c.l.b16 %v414
      %v458 = vunpack.c.h.b16 %v414
      %v459 = vunpack.c.l.b16 %v415
      %v460 = vunpack.c.h.b16 %v415
      %v461 = vunpack.c.l.b16 %v416
      %v462 = vunpack.c.h.b16 %v416
      %v463 = vunpack.c.l.b16 %v417
      %v464 = vunpack.c.h.b16 %v417
      %v465 = vunpack.c.l.b16 %v418
      %v466 = vunpack.c.h.b16 %v418
      %v467 = vpack.c.b16 %v437, %v435
      %v468 = vpack.c.b16 %v438, %v436
      %v469 = vpack.c.b16 %v441, %v439
      %v470 = vpack.c.b16 %v442, %v440
      %v471 = vpack.c.b16 %v445, %v443
      %v472 = vpack.c.b16 %v446, %v444
      %v473 = vpack.c.b16 %v449, %v447
      %v474 = vpack.c.b16 %v450, %v448
      %v475 = vpack.c.b16 %v453, %v451
      %v476 = vpack.c.b16 %v454, %v452
      %v477 = vpack.c.b16 %v457, %v455
      %v478 = vpack.c.b16 %v458, %v456
      %v479 = vpack.c.b16 %v461, %v459
      %v480 = vpack.c.b16 %v462, %v460
      %v481 = vpack.c.b16 %v465, %v463
      %v482 = vpack.c.b16 %v466, %v464
      %499 = vmatprep.subr.bf16.mxu0 %v468
      %500 = vmatpush1.bf16.msra.mxu0 %v467
      %501 = vmatprep.subr.bf16.mxu0 %v470
      %502 = vmatpush1.bf16.msra.mxu0 %v469
      %503 = vmatprep.subr.bf16.mxu0 %v472
      %504 = vmatpush1.bf16.msra.mxu0 %v471
      %505 = vmatprep.subr.bf16.mxu0 %v474
      %506 = vmatpush1.bf16.msra.mxu0 %v473
      %507 = vmatprep.subr.bf16.mxu0 %v476
      %508 = vmatpush1.bf16.msra.mxu0 %v475
      %509 = vmatprep.subr.bf16.mxu0 %v478
      %510 = vmatpush1.bf16.msra.mxu0 %v477
      %511 = vmatprep.subr.bf16.mxu0 %v480
      %512 = vmatpush1.bf16.msra.mxu0 %v479
      %513 = vmatprep.subr.bf16.mxu0 %v482
      %514 = vmatpush1.bf16.msra.mxu0 %v481
      %515 = vmatprep.subr.bf16.mxu0 0
      %516 = vmatpush1.bf16.msra.mxu0 0
      %517 = vmatprep.subr.bf16.mxu0 0
      %518 = vmatpush1.bf16.msra.mxu0 0
      %519 = vmatprep.subr.bf16.mxu0 0
      %520 = vmatpush1.bf16.msra.mxu0 0
      %521 = vmatprep.subr.bf16.mxu0 0
      %522 = vmatpush1.bf16.msra.mxu0 0
      %523 = vmatprep.subr.bf16.mxu0 0
      %524 = vmatpush1.bf16.msra.mxu0 0
      %525 = vmatprep.subr.bf16.mxu0 0
      %526 = vmatpush1.bf16.msra.mxu0 0
      %527 = vmatprep.subr.bf16.mxu0 0
      %528 = vmatpush1.bf16.msra.mxu0 0
      %529 = vmatprep.subr.bf16.mxu0 0
      %530 = vmatpush1.bf16.msra.mxu0 0
      %531 = vmatprep.mubr.bf16.mxu0 0
      %532 = vmatmul.mubr.bf16.gmra.mrb[0].mxu0 %v401
      %v533 = vpop.f32.mrb[0].mxu0
      %v534 = vadd.f32 0.0, %v533
      %v535 = vpop.f32.mrb[0].mxu0
      %v536 = vadd.f32 0.0, %v535
      %v537 = vpop.f32.mrb[0].mxu0
      %v538 = vadd.f32 0.0, %v537
      %v539 = vpop.f32.mrb[0].mxu0
      %v540 = vadd.f32 0.0, %v539
      %541 = vdwg.mxu0
      %v542 = vadd.f32 %v395, %v534
      %v543 = vadd.f32 %v396, %v536
      %v544 = vadd.f32 %v397, %v538
      %v545 = vadd.f32 %v398, %v540
      %v546 = vld [vmem:[#allocation2 + $0x2] sm:$0xff]
      %v547 = vld [vmem:[#allocation2 + $0xa] sm:$0xff]
      %v548 = vpack.c.bf16 %v547, %v546
      %s549 = scalar_lea.vmem %s1, 256
      %v550 = vld [vmem:[%s549] sm:$0xff]
      %v551 = vld [vmem:[%s549 + $0x8] sm:$0xff]
      %v552 = vld [vmem:[%s549 + $0x10] sm:$0xff]
      %v553 = vld [vmem:[%s549 + $0x18] sm:$0xff]
      %v554 = vld [vmem:[%s549 + $0x20] sm:$0xff]
      %v555 = vld [vmem:[%s549 + $0x28] sm:$0xff]
      %v556 = vld [vmem:[%s549 + $0x30] sm:$0xff]
      %v557 = vld [vmem:[%s549 + $0x38] sm:$0xff]
      %v558 = vld [vmem:[%s549 + $0x40] sm:$0xff]
      %v559 = vld [vmem:[%s549 + $0x48] sm:$0xff]
      %v560 = vld [vmem:[%s549 + $0x50] sm:$0xff]
      %v561 = vld [vmem:[%s549 + $0x58] sm:$0xff]
      %v562 = vld [vmem:[%s549 + $0x60] sm:$0xff]
      %v563 = vld [vmem:[%s549 + $0x68] sm:$0xff]
      %v564 = vld [vmem:[%s549 + $0x70] sm:$0xff]
      %v565 = vld [vmem:[%s549 + $0x78] sm:$0xff]
      %v582 = vunpack.c.l.b16 %v550
      %v583 = vunpack.c.h.b16 %v550
      %v584 = vunpack.c.l.b16 %v551
      %v585 = vunpack.c.h.b16 %v551
      %v586 = vunpack.c.l.b16 %v552
      %v587 = vunpack.c.h.b16 %v552
      %v588 = vunpack.c.l.b16 %v553
      %v589 = vunpack.c.h.b16 %v553
      %v590 = vunpack.c.l.b16 %v554
      %v591 = vunpack.c.h.b16 %v554
      %v592 = vunpack.c.l.b16 %v555
      %v593 = vunpack.c.h.b16 %v555
      %v594 = vunpack.c.l.b16 %v556
      %v595 = vunpack.c.h.b16 %v556
      %v596 = vunpack.c.l.b16 %v557
      %v597 = vunpack.c.h.b16 %v557
      %v598 = vunpack.c.l.b16 %v558
      %v599 = vunpack.c.h.b16 %v558
      %v600 = vunpack.c.l.b16 %v559
      %v601 = vunpack.c.h.b16 %v559
      %v602 = vunpack.c.l.b16 %v560
      %v603 = vunpack.c.h.b16 %v560
      %v604 = vunpack.c.l.b16 %v561
      %v605 = vunpack.c.h.b16 %v561
      %v606 = vunpack.c.l.b16 %v562
      %v607 = vunpack.c.h.b16 %v562
      %v608 = vunpack.c.l.b16 %v563
      %v609 = vunpack.c.h.b16 %v563
      %v610 = vunpack.c.l.b16 %v564
      %v611 = vunpack.c.h.b16 %v564
      %v612 = vunpack.c.l.b16 %v565
      %v613 = vunpack.c.h.b16 %v565
      %v614 = vpack.c.b16 %v584, %v582
      %v615 = vpack.c.b16 %v585, %v583
      %v616 = vpack.c.b16 %v588, %v586
      %v617 = vpack.c.b16 %v589, %v587
      %v618 = vpack.c.b16 %v592, %v590
      %v619 = vpack.c.b16 %v593, %v591
      %v620 = vpack.c.b16 %v596, %v594
      %v621 = vpack.c.b16 %v597, %v595
      %v622 = vpack.c.b16 %v600, %v598
      %v623 = vpack.c.b16 %v601, %v599
      %v624 = vpack.c.b16 %v604, %v602
      %v625 = vpack.c.b16 %v605, %v603
      %v626 = vpack.c.b16 %v608, %v606
      %v627 = vpack.c.b16 %v609, %v607
      %v628 = vpack.c.b16 %v612, %v610
      %v629 = vpack.c.b16 %v613, %v611
      %646 = vmatprep.subr.bf16.mxu0 %v615
      %647 = vmatpush1.bf16.msra.mxu0 %v614
      %648 = vmatprep.subr.bf16.mxu0 %v617
      %649 = vmatpush1.bf16.msra.mxu0 %v616
      %650 = vmatprep.subr.bf16.mxu0 %v619
      %651 = vmatpush1.bf16.msra.mxu0 %v618
      %652 = vmatprep.subr.bf16.mxu0 %v621
      %653 = vmatpush1.bf16.msra.mxu0 %v620
      %654 = vmatprep.subr.bf16.mxu0 %v623
      %655 = vmatpush1.bf16.msra.mxu0 %v622
      %656 = vmatprep.subr.bf16.mxu0 %v625
      %657 = vmatpush1.bf16.msra.mxu0 %v624
      %658 = vmatprep.subr.bf16.mxu0 %v627
      %659 = vmatpush1.bf16.msra.mxu0 %v626
      %660 = vmatprep.subr.bf16.mxu0 %v629
      %661 = vmatpush1.bf16.msra.mxu0 %v628
      %662 = vmatprep.subr.bf16.mxu0 0
      %663 = vmatpush1.bf16.msra.mxu0 0
      %664 = vmatprep.subr.bf16.mxu0 0
      %665 = vmatpush1.bf16.msra.mxu0 0
      %666 = vmatprep.subr.bf16.mxu0 0
      %667 = vmatpush1.bf16.msra.mxu0 0
      %668 = vmatprep.subr.bf16.mxu0 0
      %669 = vmatpush1.bf16.msra.mxu0 0
      %670 = vmatprep.subr.bf16.mxu0 0
      %671 = vmatpush1.bf16.msra.mxu0 0
      %672 = vmatprep.subr.bf16.mxu0 0
      %673 = vmatpush1.bf16.msra.mxu0 0
      %674 = vmatprep.subr.bf16.mxu0 0
      %675 = vmatpush1.bf16.msra.mxu0 0
      %676 = vmatprep.subr.bf16.mxu0 0
      %677 = vmatpush1.bf16.msra.mxu0 0
      %678 = vmatprep.mubr.bf16.mxu0 0
      %679 = vmatmul.mubr.bf16.gmra.mrb[0].mxu0 %v548
      %v680 = vpop.f32.mrb[0].mxu0
      %v681 = vadd.f32 0.0, %v680
      %v682 = vpop.f32.mrb[0].mxu0
      %v683 = vadd.f32 0.0, %v682
      %v684 = vpop.f32.mrb[0].mxu0
      %v685 = vadd.f32 0.0, %v684
      %v686 = vpop.f32.mrb[0].mxu0
      %v687 = vadd.f32 0.0, %v686
      %688 = vdwg.mxu0
      %v689 = vadd.f32 %v542, %v681
      %v690 = vadd.f32 %v543, %v683
      %v691 = vadd.f32 %v544, %v685
      %v692 = vadd.f32 %v545, %v687
      %v693 = vmax.f32 %v689, 0.0
      %v694 = vmax.f32 %v690, 0.0
      %v695 = vmax.f32 %v691, 0.0
      %v696 = vmax.f32 %v692, 0.0
      %vm701 = vcmask 1040384
      %v702 = vrot.slane %v693, 7
      %v703 = vrot.slane %v694, 7
      %v704 = vrot.slane %v695, 7
      %v705 = vsel %vm701, %v702, %v704
      %v706 = vrot.slane %v696, 7
      %v707 = vsel %vm701, %v703, %v706
      %714 = vst [vmem:[#allocation3] sm:$0xfe] %v702
      %715 = vst [vmem:[#allocation3 + $0x8] sm:$0xfe] %v703
      %716 = vst [vmem:[#allocation3 + $0x10] sm:$0xff] %v705
      %717 = vst [vmem:[#allocation3 + $0x18] sm:$0xff] %v707
      %718 = vst [vmem:[#allocation3 + $0x20] sm:$0x1] %v704
      %719 = vst [vmem:[#allocation3 + $0x28] sm:$0x1] %v706
      %v720 = vld [vmem:[%s4] sm:$0x3]
      %v722 = vlaneseq
      %v723 = vshrl.u32 %v722, 7
      %v724 = vsub.s32 0, %v723
      %v725 = vrot.slane %v720, %v724
      %v726 = vlaneseq
      %v727 = vshrl.u32 %v726, 7
      %v728 = vsub.s32 1, %v727
      %v729 = vrot.slane %v720, %v728
      %v732 = vld [vmem:[#allocation3] sm:$0xff]
      %v733 = vld [vmem:[#allocation3 + $0x8] sm:$0xff]
      %v734 = vld [vmem:[#allocation3 + $0x10] sm:$0xff]
      %v735 = vld [vmem:[#allocation3 + $0x18] sm:$0xff]
      %v736 = vpack.c.bf16 %v734, %v732
      %v737 = vpack.c.bf16 %v735, %v733
      %v738 = vld [vmem:[%s2] sm:$0xff]
      %v739 = vld [vmem:[%s2 + $0x8] sm:$0xff]
      %v740 = vld [vmem:[%s2 + $0x10] sm:$0xff]
      %v741 = vld [vmem:[%s2 + $0x18] sm:$0xff]
      %v742 = vld [vmem:[%s2 + $0x20] sm:$0xff]
      %v743 = vld [vmem:[%s2 + $0x28] sm:$0xff]
      %v744 = vld [vmem:[%s2 + $0x30] sm:$0xff]
      %v745 = vld [vmem:[%s2 + $0x38] sm:$0xff]
      %v746 = vld [vmem:[%s2 + $0x40] sm:$0xff]
      %v747 = vld [vmem:[%s2 + $0x48] sm:$0xff]
      %v748 = vld [vmem:[%s2 + $0x50] sm:$0xff]
      %v749 = vld [vmem:[%s2 + $0x58] sm:$0xff]
      %v750 = vld [vmem:[%s2 + $0x60] sm:$0xff]
      %v751 = vld [vmem:[%s2 + $0x68] sm:$0xff]
      %v752 = vld [vmem:[%s2 + $0x70] sm:$0xff]
      %v753 = vld [vmem:[%s2 + $0x78] sm:$0xff]
      %v754 = vld [vmem:[%s2 + $0x80] sm:$0xff]
      %v755 = vld [vmem:[%s2 + $0x88] sm:$0xff]
      %v756 = vld [vmem:[%s2 + $0x90] sm:$0xff]
      %v757 = vld [vmem:[%s2 + $0x98] sm:$0xff]
      %v758 = vld [vmem:[%s2 + $0xa0] sm:$0xff]
      %v759 = vld [vmem:[%s2 + $0xa8] sm:$0xff]
      %v760 = vld [vmem:[%s2 + $0xb0] sm:$0xff]
      %v761 = vld [vmem:[%s2 + $0xb8] sm:$0xff]
      %v762 = vld [vmem:[%s2 + $0xc0] sm:$0xff]
      %v763 = vld [vmem:[%s2 + $0xc8] sm:$0xff]
      %v764 = vld [vmem:[%s2 + $0xd0] sm:$0xff]
      %v765 = vld [vmem:[%s2 + $0xd8] sm:$0xff]
      %v766 = vld [vmem:[%s2 + $0xe0] sm:$0xff]
      %v767 = vld [vmem:[%s2 + $0xe8] sm:$0xff]
      %v768 = vld [vmem:[%s2 + $0xf0] sm:$0xff]
      %v769 = vld [vmem:[%s2 + $0xf8] sm:$0xff]
      %v802 = vunpack.c.l.b16 %v738
      %v803 = vunpack.c.h.b16 %v738
      %v804 = vunpack.c.l.b16 %v739
      %v805 = vunpack.c.h.b16 %v739
      %v806 = vunpack.c.l.b16 %v740
      %v807 = vunpack.c.h.b16 %v740
      %v808 = vunpack.c.l.b16 %v741
      %v809 = vunpack.c.h.b16 %v741
      %v810 = vunpack.c.l.b16 %v742
      %v811 = vunpack.c.h.b16 %v742
      %v812 = vunpack.c.l.b16 %v743
      %v813 = vunpack.c.h.b16 %v743
      %v814 = vunpack.c.l.b16 %v744
      %v815 = vunpack.c.h.b16 %v744
      %v816 = vunpack.c.l.b16 %v745
      %v817 = vunpack.c.h.b16 %v745
      %v818 = vunpack.c.l.b16 %v746
      %v819 = vunpack.c.h.b16 %v746
      %v820 = vunpack.c.l.b16 %v747
      %v821 = vunpack.c.h.b16 %v747
      %v822 = vunpack.c.l.b16 %v748
      %v823 = vunpack.c.h.b16 %v748
      %v824 = vunpack.c.l.b16 %v749
      %v825 = vunpack.c.h.b16 %v749
      %v826 = vunpack.c.l.b16 %v750
      %v827 = vunpack.c.h.b16 %v750
      %v828 = vunpack.c.l.b16 %v751
      %v829 = vunpack.c.h.b16 %v751
      %v830 = vunpack.c.l.b16 %v752
      %v831 = vunpack.c.h.b16 %v752
      %v832 = vunpack.c.l.b16 %v753
      %v833 = vunpack.c.h.b16 %v753
      %v834 = vunpack.c.l.b16 %v754
      %v835 = vunpack.c.h.b16 %v754
      %v836 = vunpack.c.l.b16 %v755
      %v837 = vunpack.c.h.b16 %v755
      %v838 = vunpack.c.l.b16 %v756
      %v839 = vunpack.c.h.b16 %v756
      %v840 = vunpack.c.l.b16 %v757
      %v841 = vunpack.c.h.b16 %v757
      %v842 = vunpack.c.l.b16 %v758
      %v843 = vunpack.c.h.b16 %v758
      %v844 = vunpack.c.l.b16 %v759
      %v845 = vunpack.c.h.b16 %v759
      %v846 = vunpack.c.l.b16 %v760
      %v847 = vunpack.c.h.b16 %v760
      %v848 = vunpack.c.l.b16 %v761
      %v849 = vunpack.c.h.b16 %v761
      %v850 = vunpack.c.l.b16 %v762
      %v851 = vunpack.c.h.b16 %v762
      %v852 = vunpack.c.l.b16 %v763
      %v853 = vunpack.c.h.b16 %v763
      %v854 = vunpack.c.l.b16 %v764
      %v855 = vunpack.c.h.b16 %v764
      %v856 = vunpack.c.l.b16 %v765
      %v857 = vunpack.c.h.b16 %v765
      %v858 = vunpack.c.l.b16 %v766
      %v859 = vunpack.c.h.b16 %v766
      %v860 = vunpack.c.l.b16 %v767
      %v861 = vunpack.c.h.b16 %v767
      %v862 = vunpack.c.l.b16 %v768
      %v863 = vunpack.c.h.b16 %v768
      %v864 = vunpack.c.l.b16 %v769
      %v865 = vunpack.c.h.b16 %v769
      %v866 = vpack.c.b16 %v804, %v802
      %v867 = vpack.c.b16 %v805, %v803
      %v868 = vpack.c.b16 %v808, %v806
      %v869 = vpack.c.b16 %v809, %v807
      %v870 = vpack.c.b16 %v812, %v810
      %v871 = vpack.c.b16 %v813, %v811
      %v872 = vpack.c.b16 %v816, %v814
      %v873 = vpack.c.b16 %v817, %v815
      %v874 = vpack.c.b16 %v820, %v818
      %v875 = vpack.c.b16 %v821, %v819
      %v876 = vpack.c.b16 %v824, %v822
      %v877 = vpack.c.b16 %v825, %v823
      %v878 = vpack.c.b16 %v828, %v826
      %v879 = vpack.c.b16 %v829, %v827
      %v880 = vpack.c.b16 %v832, %v830
      %v881 = vpack.c.b16 %v833, %v831
      %v882 = vpack.c.b16 %v836, %v834
      %v883 = vpack.c.b16 %v837, %v835
      %v884 = vpack.c.b16 %v840, %v838
      %v885 = vpack.c.b16 %v841, %v839
      %v886 = vpack.c.b16 %v844, %v842
      %v887 = vpack.c.b16 %v845, %v843
      %v888 = vpack.c.b16 %v848, %v846
      %v889 = vpack.c.b16 %v849, %v847
      %v890 = vpack.c.b16 %v852, %v850
      %v891 = vpack.c.b16 %v853, %v851
      %v892 = vpack.c.b16 %v856, %v854
      %v893 = vpack.c.b16 %v857, %v855
      %v894 = vpack.c.b16 %v860, %v858
      %v895 = vpack.c.b16 %v861, %v859
      %v896 = vpack.c.b16 %v864, %v862
      %v897 = vpack.c.b16 %v865, %v863
      %930 = vmatprep.subr.bf16.mxu0 %v867
      %931 = vmatpush1.bf16.msra.mxu0 %v866
      %932 = vmatprep.subr.bf16.mxu0 %v869
      %933 = vmatpush1.bf16.msra.mxu0 %v868
      %934 = vmatprep.subr.bf16.mxu0 %v871
      %935 = vmatpush1.bf16.msra.mxu0 %v870
      %936 = vmatprep.subr.bf16.mxu0 %v873
      %937 = vmatpush1.bf16.msra.mxu0 %v872
      %938 = vmatprep.subr.bf16.mxu0 %v875
      %939 = vmatpush1.bf16.msra.mxu0 %v874
      %940 = vmatprep.subr.bf16.mxu0 %v877
      %941 = vmatpush1.bf16.msra.mxu0 %v876
      %942 = vmatprep.subr.bf16.mxu0 %v879
      %943 = vmatpush1.bf16.msra.mxu0 %v878
      %944 = vmatprep.subr.bf16.mxu0 %v881
      %945 = vmatpush1.bf16.msra.mxu0 %v880
      %946 = vmatprep.subr.bf16.mxu0 %v883
      %947 = vmatpush1.bf16.msra.mxu0 %v882
      %948 = vmatprep.subr.bf16.mxu0 %v885
      %949 = vmatpush1.bf16.msra.mxu0 %v884
      %950 = vmatprep.subr.bf16.mxu0 %v887
      %951 = vmatpush1.bf16.msra.mxu0 %v886
      %952 = vmatprep.subr.bf16.mxu0 %v889
      %953 = vmatpush1.bf16.msra.mxu0 %v888
      %954 = vmatprep.subr.bf16.mxu0 %v891
      %955 = vmatpush1.bf16.msra.mxu0 %v890
      %956 = vmatprep.subr.bf16.mxu0 %v893
      %957 = vmatpush1.bf16.msra.mxu0 %v892
      %958 = vmatprep.subr.bf16.mxu0 %v895
      %959 = vmatpush1.bf16.msra.mxu0 %v894
      %960 = vmatprep.subr.bf16.mxu0 %v897
      %961 = vmatpush1.bf16.msra.mxu0 %v896
      %962 = vmatprep.mubr.bf16.mxu0 %v737
      %963 = vmatmul.mubr.bf16.gmra.mrb[0].mxu0 %v736
      %v964 = vpop.f32.mrb[0].mxu0
      %v965 = vadd.f32 0.0, %v964
      %v966 = vpop.f32.mrb[0].mxu0
      %v967 = vadd.f32 0.0, %v966
      %v968 = vpop.f32.mrb[0].mxu0
      %v969 = vadd.f32 0.0, %v968
      %v970 = vpop.f32.mrb[0].mxu0
      %v971 = vadd.f32 0.0, %v970
      %972 = vdwg.mxu0
      %v973 = vadd.f32 %v725, %v965
      %v974 = vadd.f32 %v729, %v967
      %v975 = vadd.f32 %v725, %v969
      %v976 = vadd.f32 %v729, %v971
      %v977 = vld [vmem:[#allocation3] sm:$0xfe]
      %v978 = vld [vmem:[#allocation3 + $0x8] sm:$0xfe]
      %v979 = vld [vmem:[#allocation3 + $0x10] sm:$0xff]
      %v980 = vld [vmem:[#allocation3 + $0x18] sm:$0xff]
      %v981 = vld [vmem:[#allocation3 + $0x20] sm:$0x1]
      %v982 = vld [vmem:[#allocation3 + $0x28] sm:$0x1]
      %v983 = vpack.c.bf16 %v979, %v977
      %v984 = vpack.c.bf16 %v980, %v978
      %v985 = vpack.c.bf16 %v981, %v981
      %v986 = vpack.c.bf16 %v982, %v982
      %s987 = scalar_lea.vmem %s2, 256
      %v988 = vld [vmem:[%s987] sm:$0xff]
      %v989 = vld [vmem:[%s987 + $0x8] sm:$0xff]
      %v990 = vld [vmem:[%s987 + $0x10] sm:$0xff]
      %v991 = vld [vmem:[%s987 + $0x18] sm:$0xff]
      %v992 = vld [vmem:[%s987 + $0x20] sm:$0xff]
      %v993 = vld [vmem:[%s987 + $0x28] sm:$0xff]
      %v994 = vld [vmem:[%s987 + $0x30] sm:$0xff]
      %v995 = vld [vmem:[%s987 + $0x38] sm:$0xff]
      %v996 = vld [vmem:[%s987 + $0x40] sm:$0xff]
      %v997 = vld [vmem:[%s987 + $0x48] sm:$0xff]
      %v998 = vld [vmem:[%s987 + $0x50] sm:$0xff]
      %v999 = vld [vmem:[%s987 + $0x58] sm:$0xff]
      %v1000 = vld [vmem:[%s987 + $0x60] sm:$0xff]
      %v1001 = vld [vmem:[%s987 + $0x68] sm:$0xff]
      %v1002 = vld [vmem:[%s987 + $0x70] sm:$0xff]
      %v1003 = vld [vmem:[%s987 + $0x78] sm:$0xff]
      %v1004 = vld [vmem:[%s987 + $0x80] sm:$0xff]
      %v1005 = vld [vmem:[%s987 + $0x88] sm:$0xff]
      %v1006 = vld [vmem:[%s987 + $0x90] sm:$0xff]
      %v1007 = vld [vmem:[%s987 + $0x98] sm:$0xff]
      %v1008 = vld [vmem:[%s987 + $0xa0] sm:$0xff]
      %v1009 = vld [vmem:[%s987 + $0xa8] sm:$0xff]
      %v1010 = vld [vmem:[%s987 + $0xb0] sm:$0xff]
      %v1011 = vld [vmem:[%s987 + $0xb8] sm:$0xff]
      %v1012 = vld [vmem:[%s987 + $0xc0] sm:$0xff]
      %v1013 = vld [vmem:[%s987 + $0xc8] sm:$0xff]
      %v1014 = vld [vmem:[%s987 + $0xd0] sm:$0xff]
      %v1015 = vld [vmem:[%s987 + $0xd8] sm:$0xff]
      %v1016 = vld [vmem:[%s987 + $0xe0] sm:$0xff]
      %v1017 = vld [vmem:[%s987 + $0xe8] sm:$0xff]
      %v1018 = vld [vmem:[%s987 + $0xf0] sm:$0xff]
      %v1019 = vld [vmem:[%s987 + $0xf8] sm:$0xff]
      %vm1020 = vsmask.f32 7424
      %v1022 = vshrl.u32 %v983, 16
      %v1024 = vshll.u32 %v983, 16
      %v1026 = vrot.slane %v1024, 1
      %v1027 = vor.u32 %v1022, %v1026
      %v1029 = vshll.u32 %v985, 16
      %v1031 = vrot.slane %v1029, 1
      %v1032 = vsel %vm1020, %v1027, %v1031
      %v1034 = vshrl.u32 %v984, 16
      %v1036 = vshll.u32 %v984, 16
      %v1038 = vrot.slane %v1036, 1
      %v1039 = vor.u32 %v1034, %v1038
      %v1041 = vshll.u32 %v986, 16
      %v1043 = vrot.slane %v1041, 1
      %v1044 = vsel %vm1020, %v1039, %v1043
      %v1079 = vunpack.c.l.b16 %v988
      %v1080 = vunpack.c.h.b16 %v988
      %v1081 = vunpack.c.l.b16 %v989
      %v1082 = vunpack.c.h.b16 %v989
      %v1083 = vunpack.c.l.b16 %v990
      %v1084 = vunpack.c.h.b16 %v990
      %v1085 = vunpack.c.l.b16 %v991
      %v1086 = vunpack.c.h.b16 %v991
      %v1087 = vunpack.c.l.b16 %v992
      %v1088 = vunpack.c.h.b16 %v992
      %v1089 = vunpack.c.l.b16 %v993
      %v1090 = vunpack.c.h.b16 %v993
      %v1091 = vunpack.c.l.b16 %v994
      %v1092 = vunpack.c.h.b16 %v994
      %v1093 = vunpack.c.l.b16 %v995
      %v1094 = vunpack.c.h.b16 %v995
      %v1095 = vunpack.c.l.b16 %v996
      %v1096 = vunpack.c.h.b16 %v996
      %v1097 = vunpack.c.l.b16 %v997
      %v1098 = vunpack.c.h.b16 %v997
      %v1099 = vunpack.c.l.b16 %v998
      %v1100 = vunpack.c.h.b16 %v998
      %v1101 = vunpack.c.l.b16 %v999
      %v1102 = vunpack.c.h.b16 %v999
      %v1103 = vunpack.c.l.b16 %v1000
      %v1104 = vunpack.c.h.b16 %v1000
      %v1105 = vunpack.c.l.b16 %v1001
      %v1106 = vunpack.c.h.b16 %v1001
      %v1107 = vunpack.c.l.b16 %v1002
      %v1108 = vunpack.c.h.b16 %v1002
      %v1109 = vunpack.c.l.b16 %v1003
      %v1110 = vunpack.c.h.b16 %v1003
      %v1111 = vunpack.c.l.b16 %v1004
      %v1112 = vunpack.c.h.b16 %v1004
      %v1113 = vunpack.c.l.b16 %v1005
      %v1114 = vunpack.c.h.b16 %v1005
      %v1115 = vunpack.c.l.b16 %v1006
      %v1116 = vunpack.c.h.b16 %v1006
      %v1117 = vunpack.c.l.b16 %v1007
      %v1118 = vunpack.c.h.b16 %v1007
      %v1119 = vunpack.c.l.b16 %v1008
      %v1120 = vunpack.c.h.b16 %v1008
      %v1121 = vunpack.c.l.b16 %v1009
      %v1122 = vunpack.c.h.b16 %v1009
      %v1123 = vunpack.c.l.b16 %v1010
      %v1124 = vunpack.c.h.b16 %v1010
      %v1125 = vunpack.c.l.b16 %v1011
      %v1126 = vunpack.c.h.b16 %v1011
      %v1127 = vunpack.c.l.b16 %v1012
      %v1128 = vunpack.c.h.b16 %v1012
      %v1129 = vunpack.c.l.b16 %v1013
      %v1130 = vunpack.c.h.b16 %v1013
      %v1131 = vunpack.c.l.b16 %v1014
      %v1132 = vunpack.c.h.b16 %v1014
      %v1133 = vunpack.c.l.b16 %v1015
      %v1134 = vunpack.c.h.b16 %v1015
      %v1135 = vunpack.c.l.b16 %v1016
      %v1136 = vunpack.c.h.b16 %v1016
      %v1137 = vunpack.c.l.b16 %v1017
      %v1138 = vunpack.c.h.b16 %v1017
      %v1139 = vunpack.c.l.b16 %v1018
      %v1140 = vunpack.c.h.b16 %v1018
      %v1141 = vunpack.c.l.b16 %v1019
      %v1142 = vunpack.c.h.b16 %v1019
      %v1143 = vpack.c.b16 %v1081, %v1079
      %v1144 = vpack.c.b16 %v1082, %v1080
      %v1145 = vpack.c.b16 %v1085, %v1083
      %v1146 = vpack.c.b16 %v1086, %v1084
      %v1147 = vpack.c.b16 %v1089, %v1087
      %v1148 = vpack.c.b16 %v1090, %v1088
      %v1149 = vpack.c.b16 %v1093, %v1091
      %v1150 = vpack.c.b16 %v1094, %v1092
      %v1151 = vpack.c.b16 %v1097, %v1095
      %v1152 = vpack.c.b16 %v1098, %v1096
      %v1153 = vpack.c.b16 %v1101, %v1099
      %v1154 = vpack.c.b16 %v1102, %v1100
      %v1155 = vpack.c.b16 %v1105, %v1103
      %v1156 = vpack.c.b16 %v1106, %v1104
      %v1157 = vpack.c.b16 %v1109, %v1107
      %v1158 = vpack.c.b16 %v1110, %v1108
      %v1159 = vpack.c.b16 %v1113, %v1111
      %v1160 = vpack.c.b16 %v1114, %v1112
      %v1161 = vpack.c.b16 %v1117, %v1115
      %v1162 = vpack.c.b16 %v1118, %v1116
      %v1163 = vpack.c.b16 %v1121, %v1119
      %v1164 = vpack.c.b16 %v1122, %v1120
      %v1165 = vpack.c.b16 %v1125, %v1123
      %v1166 = vpack.c.b16 %v1126, %v1124
      %v1167 = vpack.c.b16 %v1129, %v1127
      %v1168 = vpack.c.b16 %v1130, %v1128
      %v1169 = vpack.c.b16 %v1133, %v1131
      %v1170 = vpack.c.b16 %v1134, %v1132
      %v1171 = vpack.c.b16 %v1137, %v1135
      %v1172 = vpack.c.b16 %v1138, %v1136
      %v1173 = vpack.c.b16 %v1141, %v1139
      %v1174 = vpack.c.b16 %v1142, %v1140
      %1207 = vmatprep.subr.bf16.mxu0 %v1144
      %1208 = vmatpush1.bf16.msra.mxu0 %v1143
      %1209 = vmatprep.subr.bf16.mxu0 %v1146
      %1210 = vmatpush1.bf16.msra.mxu0 %v1145
      %1211 = vmatprep.subr.bf16.mxu0 %v1148
      %1212 = vmatpush1.bf16.msra.mxu0 %v1147
      %1213 = vmatprep.subr.bf16.mxu0 %v1150
      %1214 = vmatpush1.bf16.msra.mxu0 %v1149
      %1215 = vmatprep.subr.bf16.mxu0 %v1152
      %1216 = vmatpush1.bf16.msra.mxu0 %v1151
      %1217 = vmatprep.subr.bf16.mxu0 %v1154
      %1218 = vmatpush1.bf16.msra.mxu0 %v1153
      %1219 = vmatprep.subr.bf16.mxu0 %v1156
      %1220 = vmatpush1.bf16.msra.mxu0 %v1155
      %1221 = vmatprep.subr.bf16.mxu0 %v1158
      %1222 = vmatpush1.bf16.msra.mxu0 %v1157
      %1223 = vmatprep.subr.bf16.mxu0 %v1160
      %1224 = vmatpush1.bf16.msra.mxu0 %v1159
      %1225 = vmatprep.subr.bf16.mxu0 %v1162
      %1226 = vmatpush1.bf16.msra.mxu0 %v1161
      %1227 = vmatprep.subr.bf16.mxu0 %v1164
      %1228 = vmatpush1.bf16.msra.mxu0 %v1163
      %1229 = vmatprep.subr.bf16.mxu0 %v1166
      %1230 = vmatpush1.bf16.msra.mxu0 %v1165
      %1231 = vmatprep.subr.bf16.mxu0 %v1168
      %1232 = vmatpush1.bf16.msra.mxu0 %v1167
      %1233 = vmatprep.subr.bf16.mxu0 %v1170
      %1234 = vmatpush1.bf16.msra.mxu0 %v1169
      %1235 = vmatprep.subr.bf16.mxu0 %v1172
      %1236 = vmatpush1.bf16.msra.mxu0 %v1171
      %1237 = vmatprep.subr.bf16.mxu0 %v1174
      %1238 = vmatpush1.bf16.msra.mxu0 %v1173
      %1239 = vmatprep.mubr.bf16.mxu0 %v1044
      %1240 = vmatmul.mubr.bf16.gmra.mrb[0].mxu0 %v1032
      %v1241 = vpop.f32.mrb[0].mxu0
      %v1242 = vadd.f32 0.0, %v1241
      %v1243 = vpop.f32.mrb[0].mxu0
      %v1244 = vadd.f32 0.0, %v1243
      %v1245 = vpop.f32.mrb[0].mxu0
      %v1246 = vadd.f32 0.0, %v1245
      %v1247 = vpop.f32.mrb[0].mxu0
      %v1248 = vadd.f32 0.0, %v1247
      %1249 = vdwg.mxu0
      %v1250 = vadd.f32 %v973, %v1242
      %v1251 = vadd.f32 %v974, %v1244
      %v1252 = vadd.f32 %v975, %v1246
      %v1253 = vadd.f32 %v976, %v1248
      %v1254 = vld [vmem:[#allocation3] sm:$0xfc]
      %v1255 = vld [vmem:[#allocation3 + $0x8] sm:$0xfc]
      %v1256 = vld [vmem:[#allocation3 + $0x20] sm:$0x3]
      %v1257 = vld [vmem:[#allocation3 + $0x28] sm:$0x3]
      %v1258 = vpack.c.bf16 %v979, %v1254
      %v1259 = vpack.c.bf16 %v980, %v1255
      %v1260 = vpack.c.bf16 %v1256, %v1256
      %v1261 = vpack.c.bf16 %v1257, %v1257
      %s1262 = scalar_lea.vmem %s2, 512
      %v1263 = vld [vmem:[%s1262] sm:$0xff]
      %v1264 = vld [vmem:[%s1262 + $0x8] sm:$0xff]
      %v1265 = vld [vmem:[%s1262 + $0x10] sm:$0xff]
      %v1266 = vld [vmem:[%s1262 + $0x18] sm:$0xff]
      %v1267 = vld [vmem:[%s1262 + $0x20] sm:$0xff]
      %v1268 = vld [vmem:[%s1262 + $0x28] sm:$0xff]
      %v1269 = vld [vmem:[%s1262 + $0x30] sm:$0xff]
      %v1270 = vld [vmem:[%s1262 + $0x38] sm:$0xff]
      %v1271 = vld [vmem:[%s1262 + $0x40] sm:$0xff]
      %v1272 = vld [vmem:[%s1262 + $0x48] sm:$0xff]
      %v1273 = vld [vmem:[%s1262 + $0x50] sm:$0xff]
      %v1274 = vld [vmem:[%s1262 + $0x58] sm:$0xff]
      %v1275 = vld [vmem:[%s1262 + $0x60] sm:$0xff]
      %v1276 = vld [vmem:[%s1262 + $0x68] sm:$0xff]
      %v1277 = vld [vmem:[%s1262 + $0x70] sm:$0xff]
      %v1278 = vld [vmem:[%s1262 + $0x78] sm:$0xff]
      %v1279 = vld [vmem:[%s1262 + $0x80] sm:$0xff]
      %v1280 = vld [vmem:[%s1262 + $0x88] sm:$0xff]
      %v1281 = vld [vmem:[%s1262 + $0x90] sm:$0xff]
      %v1282 = vld [vmem:[%s1262 + $0x98] sm:$0xff]
      %v1283 = vld [vmem:[%s1262 + $0xa0] sm:$0xff]
      %v1284 = vld [vmem:[%s1262 + $0xa8] sm:$0xff]
      %v1285 = vld [vmem:[%s1262 + $0xb0] sm:$0xff]
      %v1286 = vld [vmem:[%s1262 + $0xb8] sm:$0xff]
      %v1287 = vld [vmem:[%s1262 + $0xc0] sm:$0xff]
      %v1288 = vld [vmem:[%s1262 + $0xc8] sm:$0xff]
      %v1289 = vld [vmem:[%s1262 + $0xd0] sm:$0xff]
      %v1290 = vld [vmem:[%s1262 + $0xd8] sm:$0xff]
      %v1291 = vld [vmem:[%s1262 + $0xe0] sm:$0xff]
      %v1292 = vld [vmem:[%s1262 + $0xe8] sm:$0xff]
      %v1293 = vld [vmem:[%s1262 + $0xf0] sm:$0xff]
      %v1294 = vld [vmem:[%s1262 + $0xf8] sm:$0xff]
      %vm1299 = vcmask 1046528
      %v1300 = vrot.slane %v1258, 1
      %v1301 = vrot.slane %v1260, 1
      %v1302 = vsel %vm1299, %v1300, %v1301
      %v1303 = vrot.slane %v1259, 1
      %v1304 = vrot.slane %v1261, 1
      %v1305 = vsel %vm1299, %v1303, %v1304
      %v1340 = vunpack.c.l.b16 %v1263
      %v1341 = vunpack.c.h.b16 %v1263
      %v1342 = vunpack.c.l.b16 %v1264
      %v1343 = vunpack.c.h.b16 %v1264
      %v1344 = vunpack.c.l.b16 %v1265
      %v1345 = vunpack.c.h.b16 %v1265
      %v1346 = vunpack.c.l.b16 %v1266
      %v1347 = vunpack.c.h.b16 %v1266
      %v1348 = vunpack.c.l.b16 %v1267
      %v1349 = vunpack.c.h.b16 %v1267
      %v1350 = vunpack.c.l.b16 %v1268
      %v1351 = vunpack.c.h.b16 %v1268
      %v1352 = vunpack.c.l.b16 %v1269
      %v1353 = vunpack.c.h.b16 %v1269
      %v1354 = vunpack.c.l.b16 %v1270
      %v1355 = vunpack.c.h.b16 %v1270
      %v1356 = vunpack.c.l.b16 %v1271
      %v1357 = vunpack.c.h.b16 %v1271
      %v1358 = vunpack.c.l.b16 %v1272
      %v1359 = vunpack.c.h.b16 %v1272
      %v1360 = vunpack.c.l.b16 %v1273
      %v1361 = vunpack.c.h.b16 %v1273
      %v1362 = vunpack.c.l.b16 %v1274
      %v1363 = vunpack.c.h.b16 %v1274
      %v1364 = vunpack.c.l.b16 %v1275
      %v1365 = vunpack.c.h.b16 %v1275
      %v1366 = vunpack.c.l.b16 %v1276
      %v1367 = vunpack.c.h.b16 %v1276
      %v1368 = vunpack.c.l.b16 %v1277
      %v1369 = vunpack.c.h.b16 %v1277
      %v1370 = vunpack.c.l.b16 %v1278
      %v1371 = vunpack.c.h.b16 %v1278
      %v1372 = vunpack.c.l.b16 %v1279
      %v1373 = vunpack.c.h.b16 %v1279
      %v1374 = vunpack.c.l.b16 %v1280
      %v1375 = vunpack.c.h.b16 %v1280
      %v1376 = vunpack.c.l.b16 %v1281
      %v1377 = vunpack.c.h.b16 %v1281
      %v1378 = vunpack.c.l.b16 %v1282
      %v1379 = vunpack.c.h.b16 %v1282
      %v1380 = vunpack.c.l.b16 %v1283
      %v1381 = vunpack.c.h.b16 %v1283
      %v1382 = vunpack.c.l.b16 %v1284
      %v1383 = vunpack.c.h.b16 %v1284
      %v1384 = vunpack.c.l.b16 %v1285
      %v1385 = vunpack.c.h.b16 %v1285
      %v1386 = vunpack.c.l.b16 %v1286
      %v1387 = vunpack.c.h.b16 %v1286
      %v1388 = vunpack.c.l.b16 %v1287
      %v1389 = vunpack.c.h.b16 %v1287
      %v1390 = vunpack.c.l.b16 %v1288
      %v1391 = vunpack.c.h.b16 %v1288
      %v1392 = vunpack.c.l.b16 %v1289
      %v1393 = vunpack.c.h.b16 %v1289
      %v1394 = vunpack.c.l.b16 %v1290
      %v1395 = vunpack.c.h.b16 %v1290
      %v1396 = vunpack.c.l.b16 %v1291
      %v1397 = vunpack.c.h.b16 %v1291
      %v1398 = vunpack.c.l.b16 %v1292
      %v1399 = vunpack.c.h.b16 %v1292
      %v1400 = vunpack.c.l.b16 %v1293
      %v1401 = vunpack.c.h.b16 %v1293
      %v1402 = vunpack.c.l.b16 %v1294
      %v1403 = vunpack.c.h.b16 %v1294
      %v1404 = vpack.c.b16 %v1342, %v1340
      %v1405 = vpack.c.b16 %v1343, %v1341
      %v1406 = vpack.c.b16 %v1346, %v1344
      %v1407 = vpack.c.b16 %v1347, %v1345
      %v1408 = vpack.c.b16 %v1350, %v1348
      %v1409 = vpack.c.b16 %v1351, %v1349
      %v1410 = vpack.c.b16 %v1354, %v1352
      %v1411 = vpack.c.b16 %v1355, %v1353
      %v1412 = vpack.c.b16 %v1358, %v1356
      %v1413 = vpack.c.b16 %v1359, %v1357
      %v1414 = vpack.c.b16 %v1362, %v1360
      %v1415 = vpack.c.b16 %v1363, %v1361
      %v1416 = vpack.c.b16 %v1366, %v1364
      %v1417 = vpack.c.b16 %v1367, %v1365
      %v1418 = vpack.c.b16 %v1370, %v1368
      %v1419 = vpack.c.b16 %v1371, %v1369
      %v1420 = vpack.c.b16 %v1374, %v1372
      %v1421 = vpack.c.b16 %v1375, %v1373
      %v1422 = vpack.c.b16 %v1378, %v1376
      %v1423 = vpack.c.b16 %v1379, %v1377
      %v1424 = vpack.c.b16 %v1382, %v1380
      %v1425 = vpack.c.b16 %v1383, %v1381
      %v1426 = vpack.c.b16 %v1386, %v1384
      %v1427 = vpack.c.b16 %v1387, %v1385
      %v1428 = vpack.c.b16 %v1390, %v1388
      %v1429 = vpack.c.b16 %v1391, %v1389
      %v1430 = vpack.c.b16 %v1394, %v1392
      %v1431 = vpack.c.b16 %v1395, %v1393
      %v1432 = vpack.c.b16 %v1398, %v1396
      %v1433 = vpack.c.b16 %v1399, %v1397
      %v1434 = vpack.c.b16 %v1402, %v1400
      %v1435 = vpack.c.b16 %v1403, %v1401
      %1468 = vmatprep.subr.bf16.mxu0 %v1405
      %1469 = vmatpush1.bf16.msra.mxu0 %v1404
      %1470 = vmatprep.subr.bf16.mxu0 %v1407
      %1471 = vmatpush1.bf16.msra.mxu0 %v1406
      %1472 = vmatprep.subr.bf16.mxu0 %v1409
      %1473 = vmatpush1.bf16.msra.mxu0 %v1408
      %1474 = vmatprep.subr.bf16.mxu0 %v1411
      %1475 = vmatpush1.bf16.msra.mxu0 %v1410
      %1476 = vmatprep.subr.bf16.mxu0 %v1413
      %1477 = vmatpush1.bf16.msra.mxu0 %v1412
      %1478 = vmatprep.subr.bf16.mxu0 %v1415
      %1479 = vmatpush1.bf16.msra.mxu0 %v1414
      %1480 = vmatprep.subr.bf16.mxu0 %v1417
      %1481 = vmatpush1.bf16.msra.mxu0 %v1416
      %1482 = vmatprep.subr.bf16.mxu0 %v1419
      %1483 = vmatpush1.bf16.msra.mxu0 %v1418
      %1484 = vmatprep.subr.bf16.mxu0 %v1421
      %1485 = vmatpush1.bf16.msra.mxu0 %v1420
      %1486 = vmatprep.subr.bf16.mxu0 %v1423
      %1487 = vmatpush1.bf16.msra.mxu0 %v1422
      %1488 = vmatprep.subr.bf16.mxu0 %v1425
      %1489 = vmatpush1.bf16.msra.mxu0 %v1424
      %1490 = vmatprep.subr.bf16.mxu0 %v1427
      %1491 = vmatpush1.bf16.msra.mxu0 %v1426
      %1492 = vmatprep.subr.bf16.mxu0 %v1429
      %1493 = vmatpush1.bf16.msra.mxu0 %v1428
      %1494 = vmatprep.subr.bf16.mxu0 %v1431
      %1495 = vmatpush1.bf16.msra.mxu0 %v1430
      %1496 = vmatprep.subr.bf16.mxu0 %v1433
      %1497 = vmatpush1.bf16.msra.mxu0 %v1432
      %1498 = vmatprep.subr.bf16.mxu0 %v1435
      %1499 = vmatpush1.bf16.msra.mxu0 %v1434
      %1500 = vmatprep.mubr.bf16.mxu0 %v1305
      %1501 = vmatmul.mubr.bf16.gmra.mrb[0].mxu0 %v1302
      %v1502 = vpop.f32.mrb[0].mxu0
      %v1503 = vadd.f32 0.0, %v1502
      %v1504 = vpop.f32.mrb[0].mxu0
      %v1505 = vadd.f32 0.0, %v1504
      %v1506 = vpop.f32.mrb[0].mxu0
      %v1507 = vadd.f32 0.0, %v1506
      %v1508 = vpop.f32.mrb[0].mxu0
      %v1509 = vadd.f32 0.0, %v1508
      %1510 = vdwg.mxu0
      %v1511 = vadd.f32 %v1250, %v1503
      %v1512 = vadd.f32 %v1251, %v1505
      %v1513 = vadd.f32 %v1252, %v1507
      %v1514 = vadd.f32 %v1253, %v1509
      %v1515 = vmax.f32 %v1511, 0.0
      %v1516 = vmax.f32 %v1512, 0.0
      %v1517 = vmax.f32 %v1513, 0.0
      %v1518 = vmax.f32 %v1514, 0.0
      %1519 = vst [vmem:[%s224] sm:$0xff] %v1515
      %1520 = vst [vmem:[%s224 + $0x8] sm:$0xff] %v1516
      %1521 = vst [vmem:[%s224 + $0x10] sm:$0xff] %v1517
      %1522 = vst [vmem:[%s224 + $0x18] sm:$0xff] %v1518
      %p1523 = scmp.lt.s32.totalorder %s16, 1
      %s1524 = scalar_select %p1523, %s16, 1
      %s1525 = smul.addr %s1524, 4
      %s1526 = smul.addr %s1525, 8
      %s1527 = scalar_lea.vmem %s5, %s1526
      // Predicated region
      $region41: #{_fused_forward.1} parent=39 // pred_check
        %p1528 = pneg %p144
      $region42: #{_fused_forward.1} parent=39 // pred_check_branch
        %1530 = sbr.rel (%p1528) target = $region44
      $region43: #{_fused_forward.1} parent=39 // pred_region
        _
      $region44: #{_fused_forward.1} parent=39 // pred_fallthru
        _
    $region40: #{_fused_forward.1} parent=5 // pred_fallthru
      _
    %p1531 = scmp.le.s32.totalorder 2, %s11
    // Predicated region
    $region45: #{_fused_forward.1} parent=5 // pred_check
      %p1532 = pneg %p1531
    $region46: #{_fused_forward.1} parent=5 // pred_check_branch
      %1534 = sbr.rel (%p1532) target = $region48
    $region47: #{_fused_forward.1} parent=5 // pred_region
      %s1535 = ssub.s32 %s11, 2
      // Predicated region
      $region49: #{_fused_forward.1} parent=47 // pred_check
        %p1536 = pneg %p150
      $region50: #{_fused_forward.1} parent=47 // pred_check_branch
        %1538 = sbr.rel (%p1536) target = $region52
      $region51: #{_fused_forward.1} parent=47 // pred_region
        %p1539 = scmp.lt.s32.totalorder %s17, 1
        %s1540 = scalar_select %p1539, %s17, 1
        %s1541 = smul.addr %s1540, 4
        %s1542 = smul.addr %s1541, 8
        %s1543 = scalar_lea.vmem %s5, %s1542
      $region52: #{_fused_forward.1} parent=47 // pred_fallthru
        _
    $region48: #{_fused_forward.1} parent=5 // pred_fallthru
      _
  $region6: #{_fused_forward.1} parent=0 // loop_footer
    %s15 = sadd.s32 1, %s11
  $region7: #{_fused_forward.1} parent=0 // loop_footer_branch
    %10 = sbr.rel target = $region3
  $region8: #{_fused_forward.1} parent=0 // loop_exit
    _

</llo_original>
